<compile_context>
chip_gen: v5e
topology: v5e:2x2
jax: 0.10.0
libtpu: 0.0.40
codegen_flags: <defaults>
</compile_context>

<pallas_src>
import functools

import numpy as np
import jax
import jax.numpy as jnp
from jax.experimental import pallas as pl
from jax.experimental.pallas import tpu as pltpu


def _round_up(x, m):
    return (x + m - 1) // m * m


def _ceil_div(a, b):
    return -(-a // b)


def _pair(v):
    return v if isinstance(v, tuple) else (v, v)


def _vmem_budget_bytes():
    """~75% of this generation's physical VMEM (48 MiB on v7x, 96 MiB on v5e/v6e)."""
    cap = 64 * 1024 * 1024
    try:
        info = pltpu.get_tpu_info()
        cap = int(getattr(info, "vmem_capacity_bytes", cap))
    except Exception:
        pass
    return max(32 * 1024 * 1024, (cap * 3) // 4)


_VMEM_LIMIT = _vmem_budget_bytes()


def _compiler_params(dimension_semantics):
    return pltpu.CompilerParams(dimension_semantics=dimension_semantics,
                                vmem_limit_bytes=_VMEM_LIMIT)


# --------------------------- fused GEMM (+BN+ReLU) ---------------------------

def _fused_matmul_kernel(a_ref, w_ref, s_ref, b_ref, o_ref):
    a = a_ref[...].astype(jnp.bfloat16)                     # MXU native dtype
    acc = jnp.dot(a, w_ref[...], preferred_element_type=jnp.float32)
    y = acc * s_ref[...] + b_ref[...]                       # folded BatchNorm (f32)
    o_ref[...] = jnp.maximum(y, 0.0).astype(o_ref.dtype)    # ReLU, bf16 store


def fused_matmul_bn_relu(a, w, scale, bias):
    """(M,K) @ (K,N) + per-channel scale/bias (folded BN) + ReLU -> bf16.

    Grid over (M tiles, N tiles).  No HBM padding of M: the ragged last block
    relies on Pallas' masked edge-block stores.  The A-block index_map ignores
    the (inner) N axis so activations are DMA'd once per M tile; N tiling keeps
    weight blocks small and gives >=2 parallel grid points for the small-M tail
    stages (v7x 2-TC utilisation).
    """
    M, K = a.shape
    K2, Nout = w.shape
    assert K == K2
    tm_target = 1024 if _VMEM_LIMIT >= 72 * 1024 * 1024 else 512   # v5e/v6e vs v7x
    tm = min(tm_target, _round_up(M, 8))
    tn = Nout
    if Nout > 512:
        for cand in (512, 384, 256):
            if Nout % cand == 0:
                tn = cand
                break
    grid = (pl.cdiv(M, tm), Nout // tn)
    # TODO(synk): pipeline_mode=pl.Buffered(1) on the constant-index weight/scale/
    # bias blocks would reclaim the redundant second buffer on v7x.
    return pl.pallas_call(
        _fused_matmul_kernel,
        out_shape=jax.ShapeDtypeStruct((M, Nout), jnp.bfloat16),
        grid=grid,
        in_specs=[
            pl.BlockSpec((tm, K), lambda i, j: (i, 0)),
            pl.BlockSpec((K, tn), lambda i, j: (0, j)),
            pl.BlockSpec((1, tn), lambda i, j: (0, j)),
            pl.BlockSpec((1, tn), lambda i, j: (0, j)),
        ],
        out_specs=pl.BlockSpec((tm, tn), lambda i, j: (i, j)),
        compiler_params=_compiler_params(("parallel", "parallel")),
    )(a, w, scale, bias)


# ------------------ direct stride-1 conv (no im2col in HBM) ------------------

@functools.lru_cache(maxsize=None)
def _conv_s1_kernel(offsets, chunks):
    """Shifted-window conv on the flattened (Hp*Wp, Cin) padded image.

    offsets: static flat offsets dh*Wp+dw of the kh*kw taps.
    chunks : static (start, size) pieces of the flat output so each f32
             accumulator stays a few MiB of VMEM.
    """
    def kernel(x_ref, w_ref, s_ref, b_ref, o_ref):
        s = s_ref[...]
        b = b_ref[...]
        for c0, cs in chunks:
            acc = None
            for t, off in enumerate(offsets):
                a = x_ref[0, off + c0:off + c0 + cs, :]          # bf16 slice
                d = jnp.dot(a, w_ref[t], preferred_element_type=jnp.float32)
                acc = d if acc is None else acc + d
            y = acc * s + b
            o_ref[0, c0:c0 + cs, :] = jnp.maximum(y, 0.0).astype(o_ref.dtype)
    return kernel


def conv2d_s1_bn_relu(x, w_taps, scale, bias, kh, kw, ph, pw):
    """stride-1 KxK conv + folded BN + ReLU (NHWC), as kh*kw shifted GEMMs.

    The padded image is flattened to (Hp*Wp, Cin); output flat position
    p = r*Wp + c needs x_flat[p + dh*Wp + dw].  Positions with c >= OW are
    garbage (row wrap-around) and are cropped by a cheap wrapper-side reshape.
    This replaces the kh*kw x HBM inflation of im2col with a single input pad.
    """
    N, H, W, C = x.shape
    x = x.astype(jnp.bfloat16)
    if ph or pw:
        x = jnp.pad(x, ((0, 0), (ph, ph), (pw, pw), (0, 0)))
    Hp, Wp = H + 2 * ph, W + 2 * pw
    OH, OW = Hp - kh + 1, Wp - kw + 1
    Lin = Hp * Wp
    Lout = (OH - 1) * Wp + OW               # flat output length (incl. garbage cols)
    nt, _, Cout = w_taps.shape
    xf = x.reshape(N, Lin, C)               # free reshape (row-major NHWC)
    offsets = tuple(dh * Wp + dw for dh in range(kh) for dw in range(kw))
    # chunk the flat output so each f32 accumulator is <= ~4 MiB
    n_chunks = max(1, _ceil_div(Lout * Cout * 4, 4 * 1024 * 1024))
    csize = _round_up(_ceil_div(Lout, n_chunks), 8)
    chunks = []
    c0 = 0
    while c0 < Lout:
        chunks.append((c0, min(csize, Lout - c0)))
        c0 += csize
    out = pl.pallas_call(
        _conv_s1_kernel(offsets, tuple(chunks)),
        out_shape=jax.ShapeDtypeStruct((N, Lout, Cout), jnp.bfloat16),
        grid=(N,),
        in_specs=[
            pl.BlockSpec((1, Lin, C), lambda n: (n, 0, 0)),      # whole image in VMEM
            pl.BlockSpec((nt, C, Cout), lambda n: (0, 0, 0)),    # VMEM-resident weights
            pl.BlockSpec((1, Cout), lambda n: (0, 0)),
            pl.BlockSpec((1, Cout), lambda n: (0, 0)),
        ],
        out_specs=pl.BlockSpec((1, Lout, Cout), lambda n: (n, 0, 0)),
        compiler_params=_compiler_params(("parallel",)),
    )(xf, w_taps, scale, bias)
    if OW == Wp:                             # kw == 1 (7x1 etc): no garbage columns
        return out.reshape(N, OH, OW, Cout)
    out = jnp.pad(out, ((0, 0), (0, OH * Wp - Lout), (0, 0)))   # pad kw-1 positions
    return out.reshape(N, OH, Wp, Cout)[:, :, :OW, :]


# --------------------------------- pooling -----------------------------------

@functools.lru_cache(maxsize=None)
def _window_max_kernel(kh, kw):
    def kernel(x_ref, o_ref):
        oh, ow = o_ref.shape[1], o_ref.shape[2]
        x = x_ref[0]
        acc = x[0:oh, 0:ow, :]
        for dh in range(kh):
            for dw in range(kw):
                if dh == 0 and dw == 0:
                    continue
                acc = jnp.maximum(acc, x[dh:dh + oh, dw:dw + ow, :])
        o_ref[0] = acc
    return kernel


def max_pool_3x3_s2(x):
    """nn.MaxPool2d(kernel_size=3, stride=2), padding=0 (direct windowed kernel)."""
    N, H, W, C = x.shape
    FH, FW = H - 2, W - 2                       # full-res (stride-1) pooled size
    full = pl.pallas_call(
        _window_max_kernel(3, 3),
        out_shape=jax.ShapeDtypeStruct((N, FH, FW, C), x.dtype),
        grid=(N,),
        in_specs=[pl.BlockSpec((1, H, W, C), lambda n: (n, 0, 0, 0))],
        out_specs=pl.BlockSpec((1, FH, FW, C), lambda n: (n, 0, 0, 0)),
        compiler_params=_compiler_params(("parallel",)),
    )(x)
    # TODO(synk): emit the stride-2 subsample inside the kernel via strided stores
    # instead of this wrapper-side strided slice.
    return full[:, ::2, ::2, :]


def _avg_pool3x3_kernel(x_ref, o_ref):
    h, w = o_ref.shape[1], o_ref.shape[2]
    x = x_ref[0]                                 # (h+2, w+2, C) in VMEM
    acc = x[0:h, 0:w, :].astype(jnp.float32)
    for dh in range(3):
        for dw in range(3):
            if dh == 0 and dw == 0:
                continue
            acc = acc + x[dh:dh + h, dw:dw + w, :].astype(jnp.float32)
    o_ref[0] = (acc * (1.0 / 9.0)).astype(o_ref.dtype)


def avg_pool_3x3_s1_p1(x):
    """F.avg_pool2d(x, 3, stride=1, padding=1), count_include_pad=True."""
    N, H, W, C = x.shape
    xp = jnp.pad(x, ((0, 0), (1, 1), (1, 1), (0, 0)))
    return pl.pallas_call(
        _avg_pool3x3_kernel,
        out_shape=jax.ShapeDtypeStruct((N, H, W, C), x.dtype),
        grid=(N,),
        in_specs=[pl.BlockSpec((1, H + 2, W + 2, C), lambda n: (n, 0, 0, 0))],
        out_specs=pl.BlockSpec((1, H, W, C), lambda n: (n, 0, 0, 0)),
        compiler_params=_compiler_params(("parallel",)),
    )(xp)


def _global_avg_pool_kernel(x_ref, o_ref):
    o_ref[...] = jnp.mean(x_ref[...].astype(jnp.float32), axis=(1, 2), keepdims=True)


def adaptive_avg_pool_1x1(x):
    """nn.AdaptiveAvgPool2d((1,1)) -> NHWC (N,1,1,C), f32 features."""
    N, H, W, C = x.shape
    return pl.pallas_call(
        _global_avg_pool_kernel,
        out_shape=jax.ShapeDtypeStruct((N, 1, 1, C), jnp.float32),
        grid=(N,),
        in_specs=[pl.BlockSpec((1, H, W, C), lambda n: (n, 0, 0, 0))],
        out_specs=pl.BlockSpec((1, 1, 1, C), lambda n: (n, 0, 0, 0)),
        compiler_params=_compiler_params(("parallel",)),
    )(x)


# -------------------- plain-JAX glue (stride-2 convs only) -------------------

def _im2col(x, kh, kw, sh, sw, ph, pw):
    """NHWC -> (N, OH, OW, kh*kw*C) patches, inner order (kh, kw, c).

    Only used for the handful of stride-2 convs, whose outputs are 4x smaller
    than their inputs, so the kh*kw inflation is cheap (bf16 patches).
    """
    N, H, W, C = x.shape
    if ph or pw:
        x = jnp.pad(x, ((0, 0), (ph, ph), (pw, pw), (0, 0)))
    Hp, Wp = H + 2 * ph, W + 2 * pw
    OH = (Hp - kh) // sh + 1
    OW = (Wp - kw) // sw + 1
    cols = []
    for dh in range(kh):
        for dw in range(kw):
            cols.append(x[:, dh:dh + sh * (OH - 1) + 1:sh,
                          dw:dw + sw * (OW - 1) + 1:sw, :])
    return jnp.concatenate(cols, axis=-1), OH, OW


# ------------------------- parameterized layers ------------------------------

_PARAM_RNG = np.random.default_rng(0)   # deterministic synthetic params


class BasicConv2d:
    """Conv2d(bias=False) + BatchNorm2d(eps=1e-3) + ReLU (BN folded into scale/bias)."""

    def __init__(self, cin, cout, kernel_size, stride=1, padding=0,
                 input_scale=1.0, input_shift=0.0):
        kh, kw = _pair(kernel_size)
        sh, sw = _pair(stride)
        ph, pw = _pair(padding)
        fan_in = cin * kh * kw
        w = (_PARAM_RNG.standard_normal((cout, cin, kh, kw)).astype(np.float32)
             * np.sqrt(2.0 / fan_in))
        gamma = 1.0 + 0.05 * _PARAM_RNG.standard_normal(cout).astype(np.float32)
        beta = 0.05 * _PARAM_RNG.standard_normal(cout).astype(np.float32)
        r_mean = 0.05 * _PARAM_RNG.standard_normal(cout).astype(np.float32)
        r_var = 1.0 + 0.05 * np.abs(
            _PARAM_RNG.standard_normal(cout)).astype(np.float32)
        scale = gamma / np.sqrt(r_var + 1e-3)
        bias = beta - r_mean * scale
        w4 = np.transpose(w, (2, 3, 1, 0))                  # (kh,kw,cin,cout)
        w2d = w4.reshape(kh * kw * cin, cout)
        # Fold an elementwise affine input transform (x -> a*x + b), e.g. the
        # module's normalize_input 2*x - 1, into scale/bias.  Only valid with
        # zero padding (every window sees real input values).
        if input_scale != 1.0 or input_shift != 0.0:
            assert ph == 0 and pw == 0, "input-affine fold requires zero padding"
            colsum = w2d.sum(axis=0)                        # (cout,)
            bias = bias + scale * np.float32(input_shift) * colsum
            scale = scale * np.float32(input_scale)
        self.w_mat = jnp.asarray(w2d).astype(jnp.bfloat16)                 # GEMM form
        self.w_taps = jnp.asarray(w4.reshape(kh * kw, cin, cout)).astype(jnp.bfloat16)
        self.scale = jnp.asarray(scale.reshape(1, cout).astype(np.float32))
        self.bias = jnp.asarray(bias.reshape(1, cout).astype(np.float32))
        self.kh, self.kw, self.sh, self.sw, self.ph, self.pw = kh, kw, sh, sw, ph, pw

    def __call__(self, x):
        N, H, W, C = x.shape
        if (self.kh == 1 and self.kw == 1 and self.sh == 1 and self.sw == 1
                and self.ph == 0 and self.pw == 0):
            a = x.reshape(N * H * W, C)                     # free reshape, no im2col
            y = fused_matmul_bn_relu(a, self.w_mat, self.scale, self.bias)
            return y.reshape(N, H, W, -1)
        if self.sh == 1 and self.sw == 1:
            # direct shifted-window conv: no im2col materialization in HBM
            return conv2d_s1_bn_relu(x, self.w_taps, self.scale, self.bias,
                                     self.kh, self.kw, self.ph, self.pw)
        # stride-2 convs (few, small outputs): bf16 im2col + fused GEMM
        patches, OH, OW = _im2col(x.astype(jnp.bfloat16), self.kh, self.kw,
                                  self.sh, self.sw, self.ph, self.pw)
        a = patches.reshape(N * OH * OW, -1)
        y = fused_matmul_bn_relu(a, self.w_mat, self.scale, self.bias)
        return y.reshape(N, OH, OW, -1)


class _Fused1x1:
    """Several 1x1 BasicConv2d branches reading the same tensor -> one GEMM."""

    def __init__(self, convs):
        self.w = jnp.concatenate([c.w_mat for c in convs], axis=1)
        self.s = jnp.concatenate([c.scale for c in convs], axis=1)
        self.b = jnp.concatenate([c.bias for c in convs], axis=1)
        self.sizes = [int(c.w_mat.shape[1]) for c in convs]

    def __call__(self, x):
        N, H, W, C = x.shape
        y = fused_matmul_bn_relu(x.reshape(N * H * W, C), self.w, self.s, self.b)
        y = y.reshape(N, H, W, -1)
        outs, o = [], 0
        for n in self.sizes:
            outs.append(y[..., o:o + n])
            o += n
        return outs


class InceptionA:
    def __init__(self, cin, pool_features):
        self.branch1x1 = BasicConv2d(cin, 64, 1)
        self.branch5x5_1 = BasicConv2d(cin, 48, 1)
        self.branch5x5_2 = BasicConv2d(48, 64, 5, padding=2)
        self.branch3x3dbl_1 = BasicConv2d(cin, 64, 1)
        self.branch3x3dbl_2 = BasicConv2d(64, 96, 3, padding=1)
        self.branch3x3dbl_3 = BasicConv2d(96, 96, 3, padding=1)
        self.branch_pool = BasicConv2d(cin, pool_features, 1)
        self._stem = _Fused1x1([self.branch1x1, self.branch5x5_1,
                                self.branch3x3dbl_1])

    def __call__(self, x):
        b1, b5_in, b3_in = self._stem(x)
        b5 = self.branch5x5_2(b5_in)
        b3 = self.branch3x3dbl_3(self.branch3x3dbl_2(b3_in))
        bp = self.branch_pool(avg_pool_3x3_s1_p1(x))
        return jnp.concatenate([b1, b5, b3, bp], axis=-1)


class InceptionB:
    def __init__(self, cin):
        self.branch3x3 = BasicConv2d(cin, 384, 3, stride=2)
        self.branch3x3dbl_1 = BasicConv2d(cin, 64, 1)
        self.branch3x3dbl_2 = BasicConv2d(64, 96, 3, padding=1)
        self.branch3x3dbl_3 = BasicConv2d(96, 96, 3, stride=2)

    def __call__(self, x):
        b3 = self.branch3x3(x)
        bd = self.branch3x3dbl_3(self.branch3x3dbl_2(self.branch3x3dbl_1(x)))
        bp = max_pool_3x3_s2(x)
        return jnp.concatenate([b3, bd, bp], axis=-1)


class InceptionC:
    def __init__(self, cin, c7):
        self.branch1x1 = BasicConv2d(cin, 192, 1)
        self.branch7x7_1 = BasicConv2d(cin, c7, 1)
        self.branch7x7_2 = BasicConv2d(c7, c7, (1, 7), padding=(0, 3))
        self.branch7x7_3 = BasicConv2d(c7, 192, (7, 1), padding=(3, 0))
        self.branch7x7dbl_1 = BasicConv2d(cin, c7, 1)
        self.branch7x7dbl_2 = BasicConv2d(c7, c7, (7, 1), padding=(3, 0))
        self.branch7x7dbl_3 = BasicConv2d(c7, c7, (1, 7), padding=(0, 3))
        self.branch7x7dbl_4 = BasicConv2d(c7, c7, (7, 1), padding=(3, 0))
        self.branch7x7dbl_5 = BasicConv2d(c7, 192, (1, 7), padding=(0, 3))
        self.branch_pool = BasicConv2d(cin, 192, 1)
        self._stem = _Fused1x1([self.branch1x1, self.branch7x7_1,
                                self.branch7x7dbl_1])

    def __call__(self, x):
        b1, b7_in, bd_in = self._stem(x)
        b7 = self.branch7x7_3(self.branch7x7_2(b7_in))
        bd = self.branch7x7dbl_5(self.branch7x7dbl_4(self.branch7x7dbl_3(
            self.branch7x7dbl_2(bd_in))))
        bp = self.branch_pool(avg_pool_3x3_s1_p1(x))
        return jnp.concatenate([b1, b7, bd, bp], axis=-1)


class InceptionD:
    def __init__(self, cin):
        self.branch3x3_1 = BasicConv2d(cin, 192, 1)
        self.branch3x3_2 = BasicConv2d(192, 320, 3, stride=2)
        self.branch7x7x3_1 = BasicConv2d(cin, 192, 1)
        self.branch7x7x3_2 = BasicConv2d(192, 192, (1, 7), padding=(0, 3))
        self.branch7x7x3_3 = BasicConv2d(192, 192, (7, 1), padding=(3, 0))
        self.branch7x7x3_4 = BasicConv2d(192, 192, 3, stride=2)
        self._stem = _Fused1x1([self.branch3x3_1, self.branch7x7x3_1])

    def __call__(self, x):
        b3_in, b7_in = self._stem(x)
        b3 = self.branch3x3_2(b3_in)
        b7 = self.branch7x7x3_4(self.branch7x7x3_3(self.branch7x7x3_2(b7_in)))
        bp = max_pool_3x3_s2(x)
        return jnp.concatenate([b3, b7, bp], axis=-1)


class InceptionE:
    def __init__(self, cin):
        self.branch1x1 = BasicConv2d(cin, 320, 1)
        self.branch3x3_1 = BasicConv2d(cin, 384, 1)
        self.branch3x3_2a = BasicConv2d(384, 384, (1, 3), padding=(0, 1))
        self.branch3x3_2b = BasicConv2d(384, 384, (3, 1), padding=(1, 0))
        self.branch3x3dbl_1 = BasicConv2d(cin, 448, 1)
        self.branch3x3dbl_2 = BasicConv2d(448, 384, 3, padding=1)
        self.branch3x3dbl_3a = BasicConv2d(384, 384, (1, 3), padding=(0, 1))
        self.branch3x3dbl_3b = BasicConv2d(384, 384, (3, 1), padding=(1, 0))
        self.branch_pool = BasicConv2d(cin, 192, 1)
        self._stem = _Fused1x1([self.branch1x1, self.branch3x3_1,
                                self.branch3x3dbl_1])

    def __call__(self, x):
        b1, b3, bd = self._stem(x)
        b3 = jnp.concatenate([self.branch3x3_2a(b3), self.branch3x3_2b(b3)],
                             axis=-1)
        bd = self.branch3x3dbl_2(bd)
        bd = jnp.concatenate([self.branch3x3dbl_3a(bd),
                              self.branch3x3dbl_3b(bd)], axis=-1)
        bp = self.branch_pool(avg_pool_3x3_s1_p1(x))
        return jnp.concatenate([b1, b3, bd, bp], axis=-1)


class InceptionV3:
    DEFAULT_BLOCK_INDEX = 3
    BLOCK_INDEX_BY_DIM = {64: 0, 192: 1, 768: 2, 2048: 3}

    def __init__(self, output_blocks=None, resize_input=True,
                 normalize_input=True, requires_grad=False):
        del requires_grad  # inference only (no autograd state here)
        self.resize_input = resize_input
        self.normalize_input = normalize_input
        self.output_blocks = output_blocks or [self.DEFAULT_BLOCK_INDEX]
        self.last_needed_block = max(self.output_blocks)
        # normalize_input (2*x - 1) is folded into the first conv's BN fold.
        in_s, in_t = (2.0, -1.0) if normalize_input else (1.0, 0.0)
        self.blocks = []
        # Block 0
        # TODO(synk): pad the stem Cout (32/32/64) to 128 lanes for dense stores.
        self.blocks.append([
            BasicConv2d(3, 32, 3, stride=2,                   # Conv2d_1a_3x3
                        input_scale=in_s, input_shift=in_t),
            BasicConv2d(32, 32, 3),                           # Conv2d_2a_3x3
            BasicConv2d(32, 64, 3, padding=1),                # Conv2d_2b_3x3
            max_pool_3x3_s2,
        ])
        if self.last_needed_block >= 1:
            self.blocks.append([
                BasicConv2d(64, 80, 1),                       # Conv2d_3b_1x1
                BasicConv2d(80, 192, 3),                      # Conv2d_4a_3x3
                max_pool_3x3_s2,
            ])
        if self.last_needed_block >= 2:
            self.blocks.append([
                InceptionA(192, 32),   # Mixed_5b
                InceptionA(256, 64),   # Mixed_5c
                InceptionA(288, 64),   # Mixed_5d
                InceptionB(288),       # Mixed_6a
                InceptionC(768, 128),  # Mixed_6b
                InceptionC(768, 160),  # Mixed_6c
                InceptionC(768, 160),  # Mixed_6d
                InceptionC(768, 192),  # Mixed_6e
            ])
        if self.last_needed_block >= 3:
            # TODO(synk): fuse the 8x8 tail (Mixed_7a-7c + adaptive pool) into a
            # single VMEM-resident pallas_call to kill per-call latency.
            self.blocks.append([
                InceptionD(768),       # Mixed_7a
                InceptionE(1280),      # Mixed_7b
                InceptionE(2048),      # Mixed_7c
                adaptive_avg_pool_1x1,
            ])

    def __call__(self, x):
        # x: (N, 3, H, W) NCHW float32, same convention as the PyTorch module.
        if self.resize_input:
            # TODO(synk): F.interpolate(bilinear, align_corners=False) kept in
            # plain JAX (jax.image.resize half-pixel bilinear, upsampling only).
            x = jax.image.resize(
                x, (x.shape[0], x.shape[1], 299, 299), method="bilinear")
        x = jnp.transpose(x, (0, 2, 3, 1)).astype(jnp.float32)  # -> NHWC
        # (2*x - 1 normalization is folded into the first conv's scale/bias.)
        outputs = []
        for idx, block in enumerate(self.blocks):
            for layer in block:
                x = layer(x)
            if idx in self.output_blocks:
                outputs.append(jnp.transpose(x, (0, 3, 1, 2)).astype(jnp.float32))
            if idx == self.last_needed_block:
                break
        return outputs


if __name__ == "__main__":
    key = jax.random.PRNGKey(0)
    x = jax.random.uniform(key, (2, 3, 16, 16), dtype=jnp.float32)
    model = InceptionV3()                  # output_blocks = [3]
    outs = model(x)
    outs = [jax.block_until_ready(o) for o in outs]
    assert len(outs) == 1
    assert outs[0].shape == (2, 2048, 1, 1)
    assert bool(jnp.all(jnp.isfinite(outs[0])))
    print("KERNEL_OK")
</pallas_src>

<mosaic_0001>
module attributes {stable_mosaic.version = 11 : i64} {
  func.func @_fused_matmul_kernel(%arg0: i32, %arg1: i32, %arg2: memref<512x27xbf16, #tpu.memory_space<vmem>>, %arg3: memref<27x32xbf16, #tpu.memory_space<vmem>>, %arg4: memref<1x32xf32, #tpu.memory_space<vmem>>, %arg5: memref<1x32xf32, #tpu.memory_space<vmem>>, %arg6: memref<512x32xbf16, #tpu.memory_space<vmem>>) attributes {dimension_semantics = [#tpu.dimension_semantics<parallel>, #tpu.dimension_semantics<parallel>], iteration_bounds = array<i64: 87, 1>, scalar_prefetch = 0 : i64, scratch_operands = 0 : i64, tpu.core_type = #tpu.core_type<tc>, window_params = [{transform_indices = @transform_0, window_bounds = array<i64: 512, 27>}, {transform_indices = @transform_1, window_bounds = array<i64: 27, 32>}, {transform_indices = @transform_2, window_bounds = array<i64: 1, 32>}, {transform_indices = @transform_3, window_bounds = array<i64: 1, 32>}, {transform_indices = @transform_4, window_bounds = array<i64: 512, 32>}]} {
    %c0 = arith.constant 0 : index
    %c0_0 = arith.constant 0 : index
    %0 = vector.load %arg2[%c0, %c0_0] : memref<512x27xbf16, #tpu.memory_space<vmem>>, vector<512x27xbf16>
    %c0_1 = arith.constant 0 : index
    %c0_2 = arith.constant 0 : index
    %1 = vector.load %arg3[%c0_1, %c0_2] : memref<27x32xbf16, #tpu.memory_space<vmem>>, vector<27x32xbf16>
    %cst = arith.constant dense<0.000000e+00> : vector<512x32xf32>
    %2 = tpu.matmul %0, %1, %cst {dimension_numbers = #tpu.dot_dimension_numbers<[1], [0], [0], [1], [0, 0, 1, 1], [], []>} : vector<512x27xbf16>, vector<27x32xbf16>, vector<512x32xf32> -> vector<512x32xf32>
    %c0_3 = arith.constant 0 : index
    %c0_4 = arith.constant 0 : index
    %3 = vector.load %arg4[%c0_3, %c0_4] : memref<1x32xf32, #tpu.memory_space<vmem>>, vector<1x32xf32>
    %4 = vector.broadcast %3 : vector<1x32xf32> to vector<512x32xf32>
    %5 = arith.mulf %2, %4 : vector<512x32xf32>
    %c0_5 = arith.constant 0 : index
    %c0_6 = arith.constant 0 : index
    %6 = vector.load %arg5[%c0_5, %c0_6] : memref<1x32xf32, #tpu.memory_space<vmem>>, vector<1x32xf32>
    %7 = vector.broadcast %6 : vector<1x32xf32> to vector<512x32xf32>
    %8 = arith.addf %5, %7 : vector<512x32xf32>
    %cst_7 = arith.constant 0.000000e+00 : f32
    %9 = vector.broadcast %cst_7 : f32 to vector<512x32xf32>
    %10 = arith.maximumf %8, %9 : vector<512x32xf32>
    %11 = arith.truncf %10 : vector<512x32xf32> to vector<512x32xbf16>
    %c0_8 = arith.constant 0 : index
    %c0_9 = arith.constant 0 : index
    %12 = vector.load %arg6[%c0_8, %c0_9] : memref<512x32xbf16, #tpu.memory_space<vmem>>, vector<512x32xbf16>
    tpu.vector_store %arg6[%c0_8, %c0_9], %11 {strides = array<i32>} : memref<512x32xbf16, #tpu.memory_space<vmem>>, vector<512x32xbf16>,
    return
  }
  func.func @transform_0(%arg0: i32, %arg1: i32) -> (i32, i32) {
    %c0_i32 = arith.constant 0 : i32
    %c0_i32_0 = arith.constant 0 : i32
    return %arg0, %c0_i32 : i32, i32
  }
  func.func @transform_1(%arg0: i32, %arg1: i32) -> (i32, i32) {
    %c0_i32 = arith.constant 0 : i32
    %c0_i32_0 = arith.constant 0 : i32
    return %c0_i32, %arg1 : i32, i32
  }
  func.func @transform_2(%arg0: i32, %arg1: i32) -> (i32, i32) {
    %c0_i32 = arith.constant 0 : i32
    %c0_i32_0 = arith.constant 0 : i32
    return %c0_i32, %arg1 : i32, i32
  }
  func.func @transform_3(%arg0: i32, %arg1: i32) -> (i32, i32) {
    %c0_i32 = arith.constant 0 : i32
    %c0_i32_0 = arith.constant 0 : i32
    return %c0_i32, %arg1 : i32, i32
  }
  func.func @transform_4(%arg0: i32, %arg1: i32) -> (i32, i32) {
    %c0_i32 = arith.constant 0 : i32
    return %arg0, %arg1 : i32, i32
  }
}

</mosaic_0001>

<llo_original>
// kernel: tpu_custom_call.1
$region0: #{tpu_custom_call.1}
  #allocation0 [shape = 'u32[]', space=smem, size = 0x4, offset = 0x4, fixed_abs, tag = 'smem constant byte address 0x4 - core index']
  #allocation1 [shape = 'u32[72,128]{1,0:T(1,128)}', space=vmem, size = 0x9000, scoped, tag = 'internal scratch']
  %s0 = inlined_call_operand.vmem [shape: bf16[44402,27], index: 0, kind: input, shape index: {}]
  %s1 = inlined_call_operand.vmem [shape: bf16[27,32], index: 1, kind: input, shape index: {}]
  %s2 = inlined_call_operand.vmem [shape: f32[1,32], index: 2, kind: input, shape index: {}]
  %s3 = inlined_call_operand.vmem [shape: f32[1,32], index: 3, kind: input, shape index: {}]
  %s4 = inlined_call_operand.vmem [shape: bf16[44402,32], index: 4, kind: output, shape index: {}]
  %s5 = sld [smem:[#allocation0]]
  $region93: #{tpu_custom_call.1} parent=0
    _
  %s7 = ssub.s32 1, %s5
  %s8 = scalar_select 0, %s7, %s5
  $region1: #{tpu_custom_call.1} parent=0
    #allocation2 [shape = 'u8[262144]{0}', space=vmem, size = 0x40000, scoped, tag = 'output window, operand 0']
    loop: start=0, step=1, limit=89
    $region2: #{tpu_custom_call.1} parent=1 // loop_pre_header
      _
    $region3: #{tpu_custom_call.1} parent=1 // loop_header
      %s10 = sphi 0, %s14
      %p11 = scmp.ge.s32.totalorder %s10, 89
      %s17 = sphi 0, %s29
      %s18 = sphi 0, %s25
      %s19 = sphi 0, %s17
      %s20 = sphi 0, %s18
      %s21 = sphi 0, %s19
      %s22 = sphi 0, %s20
      %s32 = sphi 0, %s34
      %s35 = sphi 0, %s32
      %s36 = sphi 0, %s35
      %s52 = sphi 0, %s36
      %s58 = sphi 0, %s60
      %s61 = sphi 0, %s58
      %s62 = sphi 0, %s61
      %s78 = sphi 0, %s62
      %s84 = sphi 0, %s86
      %s87 = sphi 0, %s84
      %s88 = sphi 0, %s87
      %s104 = sphi 0, %s88
      %s110 = sphi 0, %s112
      %s113 = sphi 0, %s110
      %s114 = sphi 0, %s113
      %s130 = sphi 0, %s114
      %s138 = sphi 0, %s140
      %s141 = sphi 0, %s138
      %s142 = sphi 0, %s141
      %s158 = sphi 0, %s142
    $region4: #{tpu_custom_call.1} parent=1 // loop_header_branch
      %13 = sbr.rel (%p11) target = $region8
    $region5: #{tpu_custom_call.1} parent=1 // loop_body
      %s15 = ssub.s32 %s10, 1
      %s16 = ssub.s32 %s10, 2
      %s23 = sadd.s32 1, %s18
      %p24 = scmp.ge.s32.totalorder %s23, 1
      %s25 = scalar_select %p24, 0, %s23
      %s26 = sadd.s32 1, %s17
      %s27 = scalar_select %p24, %s26, %s17
      %p28 = scmp.ge.s32.totalorder %s27, 87
      %s29 = scalar_select %p28, 0, %s27
      %s30 = ssub.s32 %s17, %s29
      %p31 = scmp.eq.s32.totalorder %s30, 0
      %s33 = sadd.s32 %s32, 1
      %s34 = scalar_select %p31, %s32, %s33
      %p37 = pneg %p31
      %p38 = scmp.eq.s32.totalorder %s10, 86
      %p39 = por %p37, %p38
      %p40 = scmp.ne.s32.totalorder %s32, %s35
      %p41 = scmp.eq.s32.totalorder %s10, 0
      %p42 = por %p40, %p41
      %p43 = scmp.ne.s32.totalorder %s32, %s35
      %p44 = scmp.eq.s32.totalorder %s15, 86
      %p45 = por %p43, %p44
      %p46 = scmp.ne.s32.totalorder %s35, %s36
      %p47 = scmp.eq.s32.totalorder %s15, 0
      %p48 = por %p46, %p47
      %p49 = scmp.ne.s32.totalorder %s35, %s36
      %p50 = scmp.eq.s32.totalorder %s16, 86
      %p51 = por %p49, %p50
      %p53 = scmp.ne.s32.totalorder %s36, %s52
      %p54 = scmp.eq.s32.totalorder %s16, 0
      %p55 = por %p53, %p54
      %s56 = ssub.s32 %s18, %s25
      %p57 = scmp.eq.s32.totalorder %s56, 0
      %s59 = sadd.s32 %s58, 1
      %s60 = scalar_select %p57, %s58, %s59
      %p63 = pneg %p57
      %p64 = scmp.eq.s32.totalorder %s10, 86
      %p65 = por %p63, %p64
      %p66 = scmp.ne.s32.totalorder %s58, %s61
      %p67 = scmp.eq.s32.totalorder %s10, 0
      %p68 = por %p66, %p67
      %p69 = scmp.ne.s32.totalorder %s58, %s61
      %p70 = scmp.eq.s32.totalorder %s15, 86
      %p71 = por %p69, %p70
      %p72 = scmp.ne.s32.totalorder %s61, %s62
      %p73 = scmp.eq.s32.totalorder %s15, 0
      %p74 = por %p72, %p73
      %p75 = scmp.ne.s32.totalorder %s61, %s62
      %p76 = scmp.eq.s32.totalorder %s16, 86
      %p77 = por %p75, %p76
      %p79 = scmp.ne.s32.totalorder %s62, %s78
      %p80 = scmp.eq.s32.totalorder %s16, 0
      %p81 = por %p79, %p80
      %s82 = ssub.s32 %s18, %s25
      %p83 = scmp.eq.s32.totalorder %s82, 0
      %s85 = sadd.s32 %s84, 1
      %s86 = scalar_select %p83, %s84, %s85
      %p89 = pneg %p83
      %p90 = scmp.eq.s32.totalorder %s10, 86
      %p91 = por %p89, %p90
      %p92 = scmp.ne.s32.totalorder %s84, %s87
      %p93 = scmp.eq.s32.totalorder %s10, 0
      %p94 = por %p92, %p93
      %p95 = scmp.ne.s32.totalorder %s84, %s87
      %p96 = scmp.eq.s32.totalorder %s15, 86
      %p97 = por %p95, %p96
      %p98 = scmp.ne.s32.totalorder %s87, %s88
      %p99 = scmp.eq.s32.totalorder %s15, 0
      %p100 = por %p98, %p99
      %p101 = scmp.ne.s32.totalorder %s87, %s88
      %p102 = scmp.eq.s32.totalorder %s16, 86
      %p103 = por %p101, %p102
      %p105 = scmp.ne.s32.totalorder %s88, %s104
      %p106 = scmp.eq.s32.totalorder %s16, 0
      %p107 = por %p105, %p106
      %s108 = ssub.s32 %s18, %s25
      %p109 = scmp.eq.s32.totalorder %s108, 0
      %s111 = sadd.s32 %s110, 1
      %s112 = scalar_select %p109, %s110, %s111
      %p115 = pneg %p109
      %p116 = scmp.eq.s32.totalorder %s10, 86
      %p117 = por %p115, %p116
      %p118 = scmp.ne.s32.totalorder %s110, %s113
      %p119 = scmp.eq.s32.totalorder %s10, 0
      %p120 = por %p118, %p119
      %p121 = scmp.ne.s32.totalorder %s110, %s113
      %p122 = scmp.eq.s32.totalorder %s15, 86
      %p123 = por %p121, %p122
      %p124 = scmp.ne.s32.totalorder %s113, %s114
      %p125 = scmp.eq.s32.totalorder %s15, 0
      %p126 = por %p124, %p125
      %p127 = scmp.ne.s32.totalorder %s113, %s114
      %p128 = scmp.eq.s32.totalorder %s16, 86
      %p129 = por %p127, %p128
      %p131 = scmp.ne.s32.totalorder %s114, %s130
      %p132 = scmp.eq.s32.totalorder %s16, 0
      %p133 = por %p131, %p132
      %s134 = ssub.s32 %s17, %s29
      %s135 = ssub.s32 %s18, %s25
      %s136 = sor.u32 %s134, %s135
      %p137 = scmp.eq.s32.totalorder %s136, 0
      %s139 = sadd.s32 %s138, 1
      %s140 = scalar_select %p137, %s138, %s139
      %p143 = pneg %p137
      %p144 = scmp.eq.s32.totalorder %s10, 86
      %p145 = por %p143, %p144
      %p146 = scmp.ne.s32.totalorder %s138, %s141
      %p147 = scmp.eq.s32.totalorder %s10, 0
      %p148 = por %p146, %p147
      %p149 = scmp.ne.s32.totalorder %s138, %s141
      %p150 = scmp.eq.s32.totalorder %s15, 86
      %p151 = por %p149, %p150
      %p152 = scmp.ne.s32.totalorder %s141, %s142
      %p153 = scmp.eq.s32.totalorder %s15, 0
      %p154 = por %p152, %p153
      %p155 = scmp.ne.s32.totalorder %s141, %s142
      %p156 = scmp.eq.s32.totalorder %s16, 86
      %p157 = por %p155, %p156
      %p159 = scmp.ne.s32.totalorder %s142, %s158
      %p160 = scmp.eq.s32.totalorder %s16, 0
      %p161 = por %p159, %p160
      %p162 = scmp.le.s32.totalorder 1, %s10
      %p163 = scmp.lt.s32.totalorder %s10, 88
      %p164 = pnand %p162, %p163
      %p165 = pneg %p164
      // Predicated region
      $region9: #{tpu_custom_call.1} parent=5 // pred_check
        _
      $region10: #{tpu_custom_call.1} parent=5 // pred_check_branch
        %167 = sbr.rel (%p164) target = $region12
      $region11: #{tpu_custom_call.1} parent=5 // pred_region
        %s168 = ssub.s32 %s10, 1
        // Predicated region
        $region13: #{tpu_custom_call.1} parent=11 // pred_check
          %p169 = pneg %p74
        $region14: #{tpu_custom_call.1} parent=11 // pred_check_branch
          %171 = sbr.rel (%p169) target = $region16
        $region15: #{tpu_custom_call.1} parent=11 // pred_region
          %p172 = scmp.lt.s32.totalorder %s20, 0
          %s173 = scalar_select %p172, %s20, 0
          %s174 = smul.addr %s173, 4
          %s175 = scalar_lea.vmem %s1, %s174
        $region16: #{tpu_custom_call.1} parent=11 // pred_fallthru
          _
        // Predicated region
        $region17: #{tpu_custom_call.1} parent=11 // pred_check
          %p176 = pneg %p100
        $region18: #{tpu_custom_call.1} parent=11 // pred_check_branch
          %178 = sbr.rel (%p176) target = $region20
        $region19: #{tpu_custom_call.1} parent=11 // pred_region
          %p179 = scmp.lt.s32.totalorder %s20, 0
          %s180 = scalar_select %p179, %s20, 0
          %s181 = scalar_lea.vmem %s2, %s180
        $region20: #{tpu_custom_call.1} parent=11 // pred_fallthru
          _
        // Predicated region
        $region21: #{tpu_custom_call.1} parent=11 // pred_check
          %p182 = pneg %p126
        $region22: #{tpu_custom_call.1} parent=11 // pred_check_branch
          %184 = sbr.rel (%p182) target = $region24
        $region23: #{tpu_custom_call.1} parent=11 // pred_region
          %p185 = scmp.lt.s32.totalorder %s20, 0
          %s186 = scalar_select %p185, %s20, 0
          %s187 = scalar_lea.vmem %s3, %s186
        $region24: #{tpu_custom_call.1} parent=11 // pred_fallthru
          _
      $region12: #{tpu_custom_call.1} parent=5 // pred_fallthru
        _
      %p188 = scmp.lt.s32.totalorder %s10, 87
      // Predicated region
      $region25: #{tpu_custom_call.1} parent=5 // pred_check
        %p189 = pneg %p188
      $region26: #{tpu_custom_call.1} parent=5 // pred_check_branch
        %191 = sbr.rel (%p189) target = $region28
      $region27: #{tpu_custom_call.1} parent=5 // pred_region
        // Predicated region
        $region29: #{tpu_custom_call.1} parent=27 // pred_check
          %p192 = pneg %p42
        $region30: #{tpu_custom_call.1} parent=27 // pred_check_branch
          %194 = sbr.rel (%p192) target = $region32
        $region31: #{tpu_custom_call.1} parent=27 // pred_region
          %s195 = smul.u32 64, %s17
          %s196 = ssub.s32 5551, %s195
          %p197 = scmp.lt.s32.totalorder %s196, 64
          %s198 = scalar_select %p197, %s196, 64
          %s199 = smul.u32 4, %s198
          %p200 = scmp.lt.s32.totalorder %s195, 5550
          %s201 = scalar_select %p200, %s195, 5550
          %s202 = smul.addr %s201, 4
          %s203 = scalar_lea.vmem %s0, %s202
          %s204 = smul.u32 64, %s17
          %s205 = ssub.s32 5551, %s204
          %p206 = scmp.lt.s32.totalorder %s205, 64
          %s207 = scalar_select %p206, %s205, 64
          %s208 = smul.u32 4, %s207
        $region32: #{tpu_custom_call.1} parent=27 // pred_fallthru
          _
      $region28: #{tpu_custom_call.1} parent=5 // pred_fallthru
        _
      %p209 = scmp.le.s32.totalorder 1, %s10
      %p210 = scmp.lt.s32.totalorder %s10, 88
      %p211 = pnand %p209, %p210
      %p212 = pneg %p211
      // Predicated region
      $region33: #{tpu_custom_call.1} parent=5 // pred_check
        _
      $region34: #{tpu_custom_call.1} parent=5 // pred_check_branch
        %214 = sbr.rel (%p211) target = $region36
      $region35: #{tpu_custom_call.1} parent=5 // pred_region
        %s215 = ssub.s32 %s10, 1
        %s216 = smul.u32 64, %s19
        %s217 = ssub.s32 5551, %s216
        %p218 = scmp.lt.s32.totalorder %s217, 64
        %s219 = scalar_select %p218, %s217, 64
        %s220 = smul.u32 4, %s219
        %p221 = scmp.lt.s32.totalorder %s216, 5550
        %s222 = scalar_select %p221, %s216, 5550
        %s223 = smul.addr %s222, 4
        %s224 = scalar_lea.vmem %s0, %s223
        %p225 = pneg %p48
        %p226 = pneg %p45
        %p227 = scmp.lt.s32.totalorder %s20, 0
        %s228 = scalar_select %p227, %s20, 0
        %s229 = smul.addr %s228, 4
        %s230 = scalar_lea.vmem %s1, %s229
        %p231 = pneg %p74
        %p232 = pneg %p71
        %p233 = scmp.lt.s32.totalorder %s20, 0
        %s234 = scalar_select %p233, %s20, 0
        %s235 = scalar_lea.vmem %s2, %s234
        %p236 = pneg %p100
        %p237 = pneg %p97
        %p238 = scmp.lt.s32.totalorder %s20, 0
        %s239 = scalar_select %p238, %s20, 0
        %s240 = scalar_lea.vmem %s3, %s239
        %p241 = pneg %p126
        %p242 = pneg %p123
        %p243 = pneg %p154
        %p244 = pneg %p151
        %s245 = sand.u32 %s141, 1
        %s246 = sand.u32 %s141, 1
        %s247 = smul.addr %s246, 256
        %s248 = scalar_lea.vmem [#allocation2], %s247
        %s249 = smul.u32 64, %s19
        %s250 = ssub.s32 5551, %s249
        %p251 = scmp.lt.s32.totalorder %s250, 64
        %s252 = scalar_select %p251, %s250, 64
        %s253 = smul.u32 4, %s252
        %p254 = scmp.lt.s32.totalorder %s249, 5550
        %s255 = scalar_select %p254, %s249, 5550
        %s256 = smul.addr %s255, 4
        %s257 = scalar_lea.vmem %s0, %s256
        %s258 = smul.u32 64, %s19
        %s259 = ssub.s32 5551, %s258
        %p260 = scmp.lt.s32.totalorder %s259, 64
        %s261 = scalar_select %p260, %s259, 64
        %s262 = smul.u32 4, %s261
        %p263 = scmp.lt.s32.totalorder %s20, 0
        %s264 = scalar_select %p263, %s20, 0
        %s265 = smul.addr %s264, 4
        %s266 = scalar_lea.vmem %s1, %s265
        %p267 = scmp.lt.s32.totalorder %s20, 0
        %s268 = scalar_select %p267, %s20, 0
        %s269 = scalar_lea.vmem %s2, %s268
        %p270 = scmp.lt.s32.totalorder %s20, 0
        %s271 = scalar_select %p270, %s20, 0
        %s272 = scalar_lea.vmem %s3, %s271
        %s273 = smul.u32 64, %s19
        %s274 = ssub.s32 5551, %s273
        %p275 = scmp.lt.s32.totalorder %s274, 64
        %s276 = scalar_select %p275, %s274, 64
        %s277 = smul.u32 4, %s276
        %v279 = vld [vmem:[%s257] sm:$0xf]
        %v280 = vld [vmem:[%s257 + $0x4] sm:$0xf]
        %v281 = vld [vmem:[%s257 + $0x8] sm:$0xf]
        %v282 = vld [vmem:[%s257 + $0xc] sm:$0xf]
        %v283 = vld [vmem:[%s257 + $0x10] sm:$0xf]
        %v284 = vld [vmem:[%s257 + $0x14] sm:$0xf]
        %v285 = vld [vmem:[%s257 + $0x18] sm:$0xf]
        %v286 = vld [vmem:[%s257 + $0x1c] sm:$0xf]
        %v287 = vld [vmem:[%s257 + $0x20] sm:$0xf]
        %v288 = vld [vmem:[%s257 + $0x24] sm:$0xf]
        %v289 = vld [vmem:[%s257 + $0x28] sm:$0xf]
        %v290 = vld [vmem:[%s257 + $0x2c] sm:$0xf]
        %v291 = vld [vmem:[%s257 + $0x30] sm:$0xf]
        %v292 = vld [vmem:[%s257 + $0x34] sm:$0xf]
        %v293 = vld [vmem:[%s257 + $0x38] sm:$0xf]
        %v294 = vld [vmem:[%s257 + $0x3c] sm:$0xf]
        %v295 = vld [vmem:[%s257 + $0x40] sm:$0xf]
        %v296 = vld [vmem:[%s257 + $0x44] sm:$0xf]
        %v297 = vld [vmem:[%s257 + $0x48] sm:$0xf]
        %v298 = vld [vmem:[%s257 + $0x4c] sm:$0xf]
        %v299 = vld [vmem:[%s257 + $0x50] sm:$0xf]
        %v300 = vld [vmem:[%s257 + $0x54] sm:$0xf]
        %v301 = vld [vmem:[%s257 + $0x58] sm:$0xf]
        %v302 = vld [vmem:[%s257 + $0x5c] sm:$0xf]
        %v303 = vld [vmem:[%s257 + $0x60] sm:$0xf]
        %v304 = vld [vmem:[%s257 + $0x64] sm:$0xf]
        %v305 = vld [vmem:[%s257 + $0x68] sm:$0xf]
        %v306 = vld [vmem:[%s257 + $0x6c] sm:$0xf]
        %v307 = vld [vmem:[%s257 + $0x70] sm:$0xf]
        %v308 = vld [vmem:[%s257 + $0x74] sm:$0xf]
        %v309 = vld [vmem:[%s257 + $0x78] sm:$0xf]
        %v310 = vld [vmem:[%s257 + $0x7c] sm:$0xf]
        %v311 = vld [vmem:[%s257 + $0x80] sm:$0xf]
        %v312 = vld [vmem:[%s257 + $0x84] sm:$0xf]
        %v313 = vld [vmem:[%s257 + $0x88] sm:$0xf]
        %v314 = vld [vmem:[%s257 + $0x8c] sm:$0xf]
        %v315 = vld [vmem:[%s257 + $0x90] sm:$0xf]
        %v316 = vld [vmem:[%s257 + $0x94] sm:$0xf]
        %v317 = vld [vmem:[%s257 + $0x98] sm:$0xf]
        %v318 = vld [vmem:[%s257 + $0x9c] sm:$0xf]
        %v319 = vld [vmem:[%s257 + $0xa0] sm:$0xf]
        %v320 = vld [vmem:[%s257 + $0xa4] sm:$0xf]
        %v321 = vld [vmem:[%s257 + $0xa8] sm:$0xf]
        %v322 = vld [vmem:[%s257 + $0xac] sm:$0xf]
        %v323 = vld [vmem:[%s257 + $0xb0] sm:$0xf]
        %v324 = vld [vmem:[%s257 + $0xb4] sm:$0xf]
        %v325 = vld [vmem:[%s257 + $0xb8] sm:$0xf]
        %v326 = vld [vmem:[%s257 + $0xbc] sm:$0xf]
        %v327 = vld [vmem:[%s257 + $0xc0] sm:$0xf]
        %v328 = vld [vmem:[%s257 + $0xc4] sm:$0xf]
        %v329 = vld [vmem:[%s257 + $0xc8] sm:$0xf]
        %v330 = vld [vmem:[%s257 + $0xcc] sm:$0xf]
        %v331 = vld [vmem:[%s257 + $0xd0] sm:$0xf]
        %v332 = vld [vmem:[%s257 + $0xd4] sm:$0xf]
        %v333 = vld [vmem:[%s257 + $0xd8] sm:$0xf]
        %v334 = vld [vmem:[%s257 + $0xdc] sm:$0xf]
        %v335 = vld [vmem:[%s257 + $0xe0] sm:$0xf]
        %v336 = vld [vmem:[%s257 + $0xe4] sm:$0xf]
        %v337 = vld [vmem:[%s257 + $0xe8] sm:$0xf]
        %v338 = vld [vmem:[%s257 + $0xec] sm:$0xf]
        %v339 = vld [vmem:[%s257 + $0xf0] sm:$0xf]
        %v340 = vld [vmem:[%s257 + $0xf4] sm:$0xf]
        %v341 = vld [vmem:[%s257 + $0xf8] sm:$0xf]
        %v342 = vld [vmem:[%s257 + $0xfc] sm:$0xf]
        %v343 = vld [vmem:[%s266] sm:$0xf]
        %v344 = vld [vmem:[%s266 + $0x4] sm:$0xf]
        %v345 = vld [vmem:[%s266 + $0x8] sm:$0xf]
        %v346 = vld [vmem:[%s266 + $0xc] sm:$0x3]
        %v411 = vunpack.c.l.b16 %v279
        %v412 = vunpack.c.l.b16 %v280
        %v413 = vunpack.c.l.b16 %v281
        %v414 = vunpack.c.l.b16 %v282
        %v415 = vunpack.c.l.b16 %v283
        %v416 = vunpack.c.l.b16 %v284
        %v417 = vunpack.c.l.b16 %v285
        %v418 = vunpack.c.l.b16 %v286
        %v419 = vunpack.c.l.b16 %v287
        %v420 = vunpack.c.l.b16 %v288
        %v421 = vunpack.c.l.b16 %v289
        %v422 = vunpack.c.l.b16 %v290
        %v423 = vunpack.c.l.b16 %v291
        %v424 = vunpack.c.l.b16 %v292
        %v425 = vunpack.c.l.b16 %v293
        %v426 = vunpack.c.l.b16 %v294
        %v427 = vunpack.c.l.b16 %v295
        %v428 = vunpack.c.l.b16 %v296
        %v429 = vunpack.c.l.b16 %v297
        %v430 = vunpack.c.l.b16 %v298
        %v431 = vunpack.c.l.b16 %v299
        %v432 = vunpack.c.l.b16 %v300
        %v433 = vunpack.c.l.b16 %v301
        %v434 = vunpack.c.l.b16 %v302
        %v435 = vunpack.c.l.b16 %v303
        %v436 = vunpack.c.l.b16 %v304
        %v437 = vunpack.c.l.b16 %v305
        %v438 = vunpack.c.l.b16 %v306
        %v439 = vunpack.c.l.b16 %v307
        %v440 = vunpack.c.l.b16 %v308
        %v441 = vunpack.c.l.b16 %v309
        %v442 = vunpack.c.l.b16 %v310
        %v443 = vunpack.c.l.b16 %v311
        %v444 = vunpack.c.l.b16 %v312
        %v445 = vunpack.c.l.b16 %v313
        %v446 = vunpack.c.l.b16 %v314
        %v447 = vunpack.c.l.b16 %v315
        %v448 = vunpack.c.l.b16 %v316
        %v449 = vunpack.c.l.b16 %v317
        %v450 = vunpack.c.l.b16 %v318
        %v451 = vunpack.c.l.b16 %v319
        %v452 = vunpack.c.l.b16 %v320
        %v453 = vunpack.c.l.b16 %v321
        %v454 = vunpack.c.l.b16 %v322
        %v455 = vunpack.c.l.b16 %v323
        %v456 = vunpack.c.l.b16 %v324
        %v457 = vunpack.c.l.b16 %v325
        %v458 = vunpack.c.l.b16 %v326
        %v459 = vunpack.c.l.b16 %v327
        %v460 = vunpack.c.l.b16 %v328
        %v461 = vunpack.c.l.b16 %v329
        %v462 = vunpack.c.l.b16 %v330
        %v463 = vunpack.c.l.b16 %v331
        %v464 = vunpack.c.l.b16 %v332
        %v465 = vunpack.c.l.b16 %v333
        %v466 = vunpack.c.l.b16 %v334
        %v467 = vunpack.c.l.b16 %v335
        %v468 = vunpack.c.l.b16 %v336
        %v469 = vunpack.c.l.b16 %v337
        %v470 = vunpack.c.l.b16 %v338
        %v471 = vunpack.c.l.b16 %v339
        %v472 = vunpack.c.l.b16 %v340
        %v473 = vunpack.c.l.b16 %v341
        %v474 = vunpack.c.l.b16 %v342
        %v475 = vpack.c.b16 %v412, %v411
        %v476 = vpack.c.b16 %v414, %v413
        %v477 = vpack.c.b16 %v416, %v415
        %v478 = vpack.c.b16 %v418, %v417
        %v479 = vpack.c.b16 %v420, %v419
        %v480 = vpack.c.b16 %v422, %v421
        %v481 = vpack.c.b16 %v424, %v423
        %v482 = vpack.c.b16 %v426, %v425
        %v483 = vpack.c.b16 %v428, %v427
        %v484 = vpack.c.b16 %v430, %v429
        %v485 = vpack.c.b16 %v432, %v431
        %v486 = vpack.c.b16 %v434, %v433
        %v487 = vpack.c.b16 %v436, %v435
        %v488 = vpack.c.b16 %v438, %v437
        %v489 = vpack.c.b16 %v440, %v439
        %v490 = vpack.c.b16 %v442, %v441
        %v491 = vpack.c.b16 %v444, %v443
        %v492 = vpack.c.b16 %v446, %v445
        %v493 = vpack.c.b16 %v448, %v447
        %v494 = vpack.c.b16 %v450, %v449
        %v495 = vpack.c.b16 %v452, %v451
        %v496 = vpack.c.b16 %v454, %v453
        %v497 = vpack.c.b16 %v456, %v455
        %v498 = vpack.c.b16 %v458, %v457
        %v499 = vpack.c.b16 %v460, %v459
        %v500 = vpack.c.b16 %v462, %v461
        %v501 = vpack.c.b16 %v464, %v463
        %v502 = vpack.c.b16 %v466, %v465
        %v503 = vpack.c.b16 %v468, %v467
        %v504 = vpack.c.b16 %v470, %v469
        %v505 = vpack.c.b16 %v472, %v471
        %v506 = vpack.c.b16 %v474, %v473
        %v511 = vunpack.c.l.b16 %v343
        %v512 = vunpack.c.l.b16 %v344
        %v513 = vunpack.c.l.b16 %v345
        %v514 = vunpack.c.l.b16 %v346
        %v515 = vpack.c.b16 %v512, %v511
        %v516 = vpack.c.b16 %v514, %v513
        %vm518 = vcmask 220160
        %v520 = vsel %vm518, %v475, 0
        %v523 = vsel %vm518, %v476, 0
        %v526 = vsel %vm518, %v477, 0
        %v529 = vsel %vm518, %v478, 0
        %v532 = vsel %vm518, %v479, 0
        %v535 = vsel %vm518, %v480, 0
        %v538 = vsel %vm518, %v481, 0
        %v541 = vsel %vm518, %v482, 0
        %v544 = vsel %vm518, %v483, 0
        %v547 = vsel %vm518, %v484, 0
        %v550 = vsel %vm518, %v485, 0
        %v553 = vsel %vm518, %v486, 0
        %v556 = vsel %vm518, %v487, 0
        %v559 = vsel %vm518, %v488, 0
        %v562 = vsel %vm518, %v489, 0
        %v565 = vsel %vm518, %v490, 0
        %v568 = vsel %vm518, %v491, 0
        %v571 = vsel %vm518, %v492, 0
        %v574 = vsel %vm518, %v493, 0
        %v577 = vsel %vm518, %v494, 0
        %v580 = vsel %vm518, %v495, 0
        %v583 = vsel %vm518, %v496, 0
        %v586 = vsel %vm518, %v497, 0
        %v589 = vsel %vm518, %v498, 0
        %v592 = vsel %vm518, %v499, 0
        %v595 = vsel %vm518, %v500, 0
        %v598 = vsel %vm518, %v501, 0
        %v601 = vsel %vm518, %v502, 0
        %v604 = vsel %vm518, %v503, 0
        %v607 = vsel %vm518, %v504, 0
        %v610 = vsel %vm518, %v505, 0
        %v613 = vsel %vm518, %v506, 0
        %vm615 = vcmask 1044480
        %vm616 = vcmask 1045504
        %v617 = vsel %vm615, 4294967295, 65535
        %v618 = vsel %vm616, %v617, 0
        %v620 = vand.u32 %v516, %v618
        %622 = vmatpush.bf16.msra.mxu0 0
        %623 = vmatpush.bf16.msra.mxu0 0
        %624 = vmatpush.bf16.msra.mxu0 0
        %625 = vmatpush.bf16.msra.mxu0 0
        %626 = vmatpush.bf16.msra.mxu0 0
        %627 = vmatpush.bf16.msra.mxu0 0
        %628 = vmatpush.bf16.msra.mxu0 %v620
        %629 = vmatpush.bf16.msra.mxu0 %v515
        %630 = vmatmul.bf16.gmra.mxu0 %v520
        %v631 = vpop.f32.mrf.mxu0
        %v632 = vadd.f32 0.0, %v631
        %v633 = vpop.f32.mrf.mxu0
        %v634 = vadd.f32 0.0, %v633
        %635 = vmatmul.bf16.gmra.mxu0 %v523
        %v636 = vpop.f32.mrf.mxu0
        %v637 = vadd.f32 0.0, %v636
        %v638 = vpop.f32.mrf.mxu0
        %v639 = vadd.f32 0.0, %v638
        %640 = vmatmul.bf16.gmra.mxu0 %v526
        %v641 = vpop.f32.mrf.mxu0
        %v642 = vadd.f32 0.0, %v641
        %v643 = vpop.f32.mrf.mxu0
        %v644 = vadd.f32 0.0, %v643
        %645 = vmatmul.bf16.gmra.mxu0 %v529
        %v646 = vpop.f32.mrf.mxu0
        %v647 = vadd.f32 0.0, %v646
        %v648 = vpop.f32.mrf.mxu0
        %v649 = vadd.f32 0.0, %v648
        %650 = vmatmul.bf16.gmra.mxu0 %v532
        %v651 = vpop.f32.mrf.mxu0
        %v652 = vadd.f32 0.0, %v651
        %v653 = vpop.f32.mrf.mxu0
        %v654 = vadd.f32 0.0, %v653
        %655 = vmatmul.bf16.gmra.mxu0 %v535
        %v656 = vpop.f32.mrf.mxu0
        %v657 = vadd.f32 0.0, %v656
        %v658 = vpop.f32.mrf.mxu0
        %v659 = vadd.f32 0.0, %v658
        %660 = vmatmul.bf16.gmra.mxu0 %v538
        %v661 = vpop.f32.mrf.mxu0
        %v662 = vadd.f32 0.0, %v661
        %v663 = vpop.f32.mrf.mxu0
        %v664 = vadd.f32 0.0, %v663
        %665 = vmatmul.bf16.gmra.mxu0 %v541
        %v666 = vpop.f32.mrf.mxu0
        %v667 = vadd.f32 0.0, %v666
        %v668 = vpop.f32.mrf.mxu0
        %v669 = vadd.f32 0.0, %v668
        %670 = vmatmul.bf16.gmra.mxu0 %v544
        %v671 = vpop.f32.mrf.mxu0
        %v672 = vadd.f32 0.0, %v671
        %v673 = vpop.f32.mrf.mxu0
        %v674 = vadd.f32 0.0, %v673
        %675 = vmatmul.bf16.gmra.mxu0 %v547
        %v676 = vpop.f32.mrf.mxu0
        %v677 = vadd.f32 0.0, %v676
        %v678 = vpop.f32.mrf.mxu0
        %v679 = vadd.f32 0.0, %v678
        %680 = vmatmul.bf16.gmra.mxu0 %v550
        %v681 = vpop.f32.mrf.mxu0
        %v682 = vadd.f32 0.0, %v681
        %v683 = vpop.f32.mrf.mxu0
        %v684 = vadd.f32 0.0, %v683
        %685 = vmatmul.bf16.gmra.mxu0 %v553
        %v686 = vpop.f32.mrf.mxu0
        %v687 = vadd.f32 0.0, %v686
        %v688 = vpop.f32.mrf.mxu0
        %v689 = vadd.f32 0.0, %v688
        %690 = vmatmul.bf16.gmra.mxu0 %v556
        %v691 = vpop.f32.mrf.mxu0
        %v692 = vadd.f32 0.0, %v691
        %v693 = vpop.f32.mrf.mxu0
        %v694 = vadd.f32 0.0, %v693
        %695 = vmatmul.bf16.gmra.mxu0 %v559
        %v696 = vpop.f32.mrf.mxu0
        %v697 = vadd.f32 0.0, %v696
        %v698 = vpop.f32.mrf.mxu0
        %v699 = vadd.f32 0.0, %v698
        %700 = vmatmul.bf16.gmra.mxu0 %v562
        %v701 = vpop.f32.mrf.mxu0
        %v702 = vadd.f32 0.0, %v701
        %v703 = vpop.f32.mrf.mxu0
        %v704 = vadd.f32 0.0, %v703
        %705 = vmatmul.bf16.gmra.mxu0 %v565
        %v706 = vpop.f32.mrf.mxu0
        %v707 = vadd.f32 0.0, %v706
        %v708 = vpop.f32.mrf.mxu0
        %v709 = vadd.f32 0.0, %v708
        %710 = vmatmul.bf16.gmra.mxu0 %v568
        %v711 = vpop.f32.mrf.mxu0
        %v712 = vadd.f32 0.0, %v711
        %v713 = vpop.f32.mrf.mxu0
        %v714 = vadd.f32 0.0, %v713
        %715 = vmatmul.bf16.gmra.mxu0 %v571
        %v716 = vpop.f32.mrf.mxu0
        %v717 = vadd.f32 0.0, %v716
        %v718 = vpop.f32.mrf.mxu0
        %v719 = vadd.f32 0.0, %v718
        %720 = vmatmul.bf16.gmra.mxu0 %v574
        %v721 = vpop.f32.mrf.mxu0
        %v722 = vadd.f32 0.0, %v721
        %v723 = vpop.f32.mrf.mxu0
        %v724 = vadd.f32 0.0, %v723
        %725 = vmatmul.bf16.gmra.mxu0 %v577
        %v726 = vpop.f32.mrf.mxu0
        %v727 = vadd.f32 0.0, %v726
        %v728 = vpop.f32.mrf.mxu0
        %v729 = vadd.f32 0.0, %v728
        %730 = vmatmul.bf16.gmra.mxu0 %v580
        %v731 = vpop.f32.mrf.mxu0
        %v732 = vadd.f32 0.0, %v731
        %v733 = vpop.f32.mrf.mxu0
        %v734 = vadd.f32 0.0, %v733
        %735 = vmatmul.bf16.gmra.mxu0 %v583
        %v736 = vpop.f32.mrf.mxu0
        %v737 = vadd.f32 0.0, %v736
        %v738 = vpop.f32.mrf.mxu0
        %v739 = vadd.f32 0.0, %v738
        %740 = vmatmul.bf16.gmra.mxu0 %v586
        %v741 = vpop.f32.mrf.mxu0
        %v742 = vadd.f32 0.0, %v741
        %v743 = vpop.f32.mrf.mxu0
        %v744 = vadd.f32 0.0, %v743
        %745 = vmatmul.bf16.gmra.mxu0 %v589
        %v746 = vpop.f32.mrf.mxu0
        %v747 = vadd.f32 0.0, %v746
        %v748 = vpop.f32.mrf.mxu0
        %v749 = vadd.f32 0.0, %v748
        %750 = vmatmul.bf16.gmra.mxu0 %v592
        %v751 = vpop.f32.mrf.mxu0
        %v752 = vadd.f32 0.0, %v751
        %v753 = vpop.f32.mrf.mxu0
        %v754 = vadd.f32 0.0, %v753
        %755 = vmatmul.bf16.gmra.mxu0 %v595
        %v756 = vpop.f32.mrf.mxu0
        %v757 = vadd.f32 0.0, %v756
        %v758 = vpop.f32.mrf.mxu0
        %v759 = vadd.f32 0.0, %v758
        %760 = vmatmul.bf16.gmra.mxu0 %v598
        %v761 = vpop.f32.mrf.mxu0
        %v762 = vadd.f32 0.0, %v761
        %v763 = vpop.f32.mrf.mxu0
        %v764 = vadd.f32 0.0, %v763
        %765 = vmatmul.bf16.gmra.mxu0 %v601
        %v766 = vpop.f32.mrf.mxu0
        %v767 = vadd.f32 0.0, %v766
        %v768 = vpop.f32.mrf.mxu0
        %v769 = vadd.f32 0.0, %v768
        %770 = vmatmul.bf16.gmra.mxu0 %v604
        %v771 = vpop.f32.mrf.mxu0
        %v772 = vadd.f32 0.0, %v771
        %v773 = vpop.f32.mrf.mxu0
        %v774 = vadd.f32 0.0, %v773
        %775 = vmatmul.bf16.gmra.mxu0 %v607
        %v776 = vpop.f32.mrf.mxu0
        %v777 = vadd.f32 0.0, %v776
        %v778 = vpop.f32.mrf.mxu0
        %v779 = vadd.f32 0.0, %v778
        %780 = vmatmul.bf16.gmra.mxu0 %v610
        %v781 = vpop.f32.mrf.mxu0
        %v782 = vadd.f32 0.0, %v781
        %v783 = vpop.f32.mrf.mxu0
        %v784 = vadd.f32 0.0, %v783
        %785 = vmatmul.bf16.gmra.mxu0 %v613
        %v786 = vpop.f32.mrf.mxu0
        %v787 = vadd.f32 0.0, %v786
        %v788 = vpop.f32.mrf.mxu0
        %v789 = vadd.f32 0.0, %v788
        %790 = vdwg.mxu0
        %v791 = vld [vmem:[%s269] sm:$0x1]
        %v793 = vperm.slane %v791, 0
        %v795 = vmul.f32 %v632, %v793
        %v796 = vmul.f32 %v634, %v793
        %v797 = vmul.f32 %v637, %v793
        %v798 = vmul.f32 %v639, %v793
        %v799 = vmul.f32 %v642, %v793
        %v800 = vmul.f32 %v644, %v793
        %v801 = vmul.f32 %v647, %v793
        %v802 = vmul.f32 %v649, %v793
        %v803 = vmul.f32 %v652, %v793
        %v804 = vmul.f32 %v654, %v793
        %v805 = vmul.f32 %v657, %v793
        %v806 = vmul.f32 %v659, %v793
        %v807 = vmul.f32 %v662, %v793
        %v808 = vmul.f32 %v664, %v793
        %v809 = vmul.f32 %v667, %v793
        %v810 = vmul.f32 %v669, %v793
        %v811 = vmul.f32 %v672, %v793
        %v812 = vmul.f32 %v674, %v793
        %v813 = vmul.f32 %v677, %v793
        %v814 = vmul.f32 %v679, %v793
        %v815 = vmul.f32 %v682, %v793
        %v816 = vmul.f32 %v684, %v793
        %v817 = vmul.f32 %v687, %v793
        %v818 = vmul.f32 %v689, %v793
        %v819 = vmul.f32 %v692, %v793
        %v820 = vmul.f32 %v694, %v793
        %v821 = vmul.f32 %v697, %v793
        %v822 = vmul.f32 %v699, %v793
        %v823 = vmul.f32 %v702, %v793
        %v824 = vmul.f32 %v704, %v793
        %v825 = vmul.f32 %v707, %v793
        %v826 = vmul.f32 %v709, %v793
        %v827 = vmul.f32 %v712, %v793
        %v828 = vmul.f32 %v714, %v793
        %v829 = vmul.f32 %v717, %v793
        %v830 = vmul.f32 %v719, %v793
        %v831 = vmul.f32 %v722, %v793
        %v832 = vmul.f32 %v724, %v793
        %v833 = vmul.f32 %v727, %v793
        %v834 = vmul.f32 %v729, %v793
        %v835 = vmul.f32 %v732, %v793
        %v836 = vmul.f32 %v734, %v793
        %v837 = vmul.f32 %v737, %v793
        %v838 = vmul.f32 %v739, %v793
        %v839 = vmul.f32 %v742, %v793
        %v840 = vmul.f32 %v744, %v793
        %v841 = vmul.f32 %v747, %v793
        %v842 = vmul.f32 %v749, %v793
        %v843 = vmul.f32 %v752, %v793
        %v844 = vmul.f32 %v754, %v793
        %v845 = vmul.f32 %v757, %v793
        %v846 = vmul.f32 %v759, %v793
        %v847 = vmul.f32 %v762, %v793
        %v848 = vmul.f32 %v764, %v793
        %v849 = vmul.f32 %v767, %v793
        %v850 = vmul.f32 %v769, %v793
        %v851 = vmul.f32 %v772, %v793
        %v852 = vmul.f32 %v774, %v793
        %v853 = vmul.f32 %v777, %v793
        %v854 = vmul.f32 %v779, %v793
        %v855 = vmul.f32 %v782, %v793
        %v856 = vmul.f32 %v784, %v793
        %v857 = vmul.f32 %v787, %v793
        %v858 = vmul.f32 %v789, %v793
        %v859 = vld [vmem:[%s272] sm:$0x1]
        %v861 = vperm.slane %v859, 0
        %v863 = vadd.f32 %v795, %v861
        %v864 = vadd.f32 %v796, %v861
        %v865 = vadd.f32 %v797, %v861
        %v866 = vadd.f32 %v798, %v861
        %v867 = vadd.f32 %v799, %v861
        %v868 = vadd.f32 %v800, %v861
        %v869 = vadd.f32 %v801, %v861
        %v870 = vadd.f32 %v802, %v861
        %v871 = vadd.f32 %v803, %v861
        %v872 = vadd.f32 %v804, %v861
        %v873 = vadd.f32 %v805, %v861
        %v874 = vadd.f32 %v806, %v861
        %v875 = vadd.f32 %v807, %v861
        %v876 = vadd.f32 %v808, %v861
        %v877 = vadd.f32 %v809, %v861
        %v878 = vadd.f32 %v810, %v861
        %v879 = vadd.f32 %v811, %v861
        %v880 = vadd.f32 %v812, %v861
        %v881 = vadd.f32 %v813, %v861
        %v882 = vadd.f32 %v814, %v861
        %v883 = vadd.f32 %v815, %v861
        %v884 = vadd.f32 %v816, %v861
        %v885 = vadd.f32 %v817, %v861
        %v886 = vadd.f32 %v818, %v861
        %v887 = vadd.f32 %v819, %v861
        %v888 = vadd.f32 %v820, %v861
        %v889 = vadd.f32 %v821, %v861
        %v890 = vadd.f32 %v822, %v861
        %v891 = vadd.f32 %v823, %v861
        %v892 = vadd.f32 %v824, %v861
        %v893 = vadd.f32 %v825, %v861
        %v894 = vadd.f32 %v826, %v861
        %v895 = vadd.f32 %v827, %v861
        %v896 = vadd.f32 %v828, %v861
        %v897 = vadd.f32 %v829, %v861
        %v898 = vadd.f32 %v830, %v861
        %v899 = vadd.f32 %v831, %v861
        %v900 = vadd.f32 %v832, %v861
        %v901 = vadd.f32 %v833, %v861
        %v902 = vadd.f32 %v834, %v861
        %v903 = vadd.f32 %v835, %v861
        %v904 = vadd.f32 %v836, %v861
        %v905 = vadd.f32 %v837, %v861
        %v906 = vadd.f32 %v838, %v861
        %v907 = vadd.f32 %v839, %v861
        %v908 = vadd.f32 %v840, %v861
        %v909 = vadd.f32 %v841, %v861
        %v910 = vadd.f32 %v842, %v861
        %v911 = vadd.f32 %v843, %v861
        %v912 = vadd.f32 %v844, %v861
        %v913 = vadd.f32 %v845, %v861
        %v914 = vadd.f32 %v846, %v861
        %v915 = vadd.f32 %v847, %v861
        %v916 = vadd.f32 %v848, %v861
        %v917 = vadd.f32 %v849, %v861
        %v918 = vadd.f32 %v850, %v861
        %v919 = vadd.f32 %v851, %v861
        %v920 = vadd.f32 %v852, %v861
        %v921 = vadd.f32 %v853, %v861
        %v922 = vadd.f32 %v854, %v861
        %v923 = vadd.f32 %v855, %v861
        %v924 = vadd.f32 %v856, %v861
        %v925 = vadd.f32 %v857, %v861
        %v926 = vadd.f32 %v858, %v861
        %v927 = vmax.f32 %v863, 0.0
        %v928 = vmax.f32 %v864, 0.0
        %v929 = vmax.f32 %v865, 0.0
        %v930 = vmax.f32 %v866, 0.0
        %v931 = vmax.f32 %v867, 0.0
        %v932 = vmax.f32 %v868, 0.0
        %v933 = vmax.f32 %v869, 0.0
        %v934 = vmax.f32 %v870, 0.0
        %v935 = vmax.f32 %v871, 0.0
        %v936 = vmax.f32 %v872, 0.0
        %v937 = vmax.f32 %v873, 0.0
        %v938 = vmax.f32 %v874, 0.0
        %v939 = vmax.f32 %v875, 0.0
        %v940 = vmax.f32 %v876, 0.0
        %v941 = vmax.f32 %v877, 0.0
        %v942 = vmax.f32 %v878, 0.0
        %v943 = vmax.f32 %v879, 0.0
        %v944 = vmax.f32 %v880, 0.0
        %v945 = vmax.f32 %v881, 0.0
        %v946 = vmax.f32 %v882, 0.0
        %v947 = vmax.f32 %v883, 0.0
        %v948 = vmax.f32 %v884, 0.0
        %v949 = vmax.f32 %v885, 0.0
        %v950 = vmax.f32 %v886, 0.0
        %v951 = vmax.f32 %v887, 0.0
        %v952 = vmax.f32 %v888, 0.0
        %v953 = vmax.f32 %v889, 0.0
        %v954 = vmax.f32 %v890, 0.0
        %v955 = vmax.f32 %v891, 0.0
        %v956 = vmax.f32 %v892, 0.0
        %v957 = vmax.f32 %v893, 0.0
        %v958 = vmax.f32 %v894, 0.0
        %v959 = vmax.f32 %v895, 0.0
        %v960 = vmax.f32 %v896, 0.0
        %v961 = vmax.f32 %v897, 0.0
        %v962 = vmax.f32 %v898, 0.0
        %v963 = vmax.f32 %v899, 0.0
        %v964 = vmax.f32 %v900, 0.0
        %v965 = vmax.f32 %v901, 0.0
        %v966 = vmax.f32 %v902, 0.0
        %v967 = vmax.f32 %v903, 0.0
        %v968 = vmax.f32 %v904, 0.0
        %v969 = vmax.f32 %v905, 0.0
        %v970 = vmax.f32 %v906, 0.0
        %v971 = vmax.f32 %v907, 0.0
        %v972 = vmax.f32 %v908, 0.0
        %v973 = vmax.f32 %v909, 0.0
        %v974 = vmax.f32 %v910, 0.0
        %v975 = vmax.f32 %v911, 0.0
        %v976 = vmax.f32 %v912, 0.0
        %v977 = vmax.f32 %v913, 0.0
        %v978 = vmax.f32 %v914, 0.0
        %v979 = vmax.f32 %v915, 0.0
        %v980 = vmax.f32 %v916, 0.0
        %v981 = vmax.f32 %v917, 0.0
        %v982 = vmax.f32 %v918, 0.0
        %v983 = vmax.f32 %v919, 0.0
        %v984 = vmax.f32 %v920, 0.0
        %v985 = vmax.f32 %v921, 0.0
        %v986 = vmax.f32 %v922, 0.0
        %v987 = vmax.f32 %v923, 0.0
        %v988 = vmax.f32 %v924, 0.0
        %v989 = vmax.f32 %v925, 0.0
        %v990 = vmax.f32 %v926, 0.0
        %v991 = vpack.c.bf16 %v927, %v927
        %v992 = vpack.c.bf16 %v928, %v928
        %v993 = vpack.c.bf16 %v929, %v929
        %v994 = vpack.c.bf16 %v930, %v930
        %v995 = vpack.c.bf16 %v931, %v931
        %v996 = vpack.c.bf16 %v932, %v932
        %v997 = vpack.c.bf16 %v933, %v933
        %v998 = vpack.c.bf16 %v934, %v934
        %v999 = vpack.c.bf16 %v935, %v935
        %v1000 = vpack.c.bf16 %v936, %v936
        %v1001 = vpack.c.bf16 %v937, %v937
        %v1002 = vpack.c.bf16 %v938, %v938
        %v1003 = vpack.c.bf16 %v939, %v939
        %v1004 = vpack.c.bf16 %v940, %v940
        %v1005 = vpack.c.bf16 %v941, %v941
        %v1006 = vpack.c.bf16 %v942, %v942
        %v1007 = vpack.c.bf16 %v943, %v943
        %v1008 = vpack.c.bf16 %v944, %v944
        %v1009 = vpack.c.bf16 %v945, %v945
        %v1010 = vpack.c.bf16 %v946, %v946
        %v1011 = vpack.c.bf16 %v947, %v947
        %v1012 = vpack.c.bf16 %v948, %v948
        %v1013 = vpack.c.bf16 %v949, %v949
        %v1014 = vpack.c.bf16 %v950, %v950
        %v1015 = vpack.c.bf16 %v951, %v951
        %v1016 = vpack.c.bf16 %v952, %v952
        %v1017 = vpack.c.bf16 %v953, %v953
        %v1018 = vpack.c.bf16 %v954, %v954
        %v1019 = vpack.c.bf16 %v955, %v955
        %v1020 = vpack.c.bf16 %v956, %v956
        %v1021 = vpack.c.bf16 %v957, %v957
        %v1022 = vpack.c.bf16 %v958, %v958
        %v1023 = vpack.c.bf16 %v959, %v959
        %v1024 = vpack.c.bf16 %v960, %v960
        %v1025 = vpack.c.bf16 %v961, %v961
        %v1026 = vpack.c.bf16 %v962, %v962
        %v1027 = vpack.c.bf16 %v963, %v963
        %v1028 = vpack.c.bf16 %v964, %v964
        %v1029 = vpack.c.bf16 %v965, %v965
        %v1030 = vpack.c.bf16 %v966, %v966
        %v1031 = vpack.c.bf16 %v967, %v967
        %v1032 = vpack.c.bf16 %v968, %v968
        %v1033 = vpack.c.bf16 %v969, %v969
        %v1034 = vpack.c.bf16 %v970, %v970
        %v1035 = vpack.c.bf16 %v971, %v971
        %v1036 = vpack.c.bf16 %v972, %v972
        %v1037 = vpack.c.bf16 %v973, %v973
        %v1038 = vpack.c.bf16 %v974, %v974
        %v1039 = vpack.c.bf16 %v975, %v975
        %v1040 = vpack.c.bf16 %v976, %v976
        %v1041 = vpack.c.bf16 %v977, %v977
        %v1042 = vpack.c.bf16 %v978, %v978
        %v1043 = vpack.c.bf16 %v979, %v979
        %v1044 = vpack.c.bf16 %v980, %v980
        %v1045 = vpack.c.bf16 %v981, %v981
        %v1046 = vpack.c.bf16 %v982, %v982
        %v1047 = vpack.c.bf16 %v983, %v983
        %v1048 = vpack.c.bf16 %v984, %v984
        %v1049 = vpack.c.bf16 %v985, %v985
        %v1050 = vpack.c.bf16 %v986, %v986
        %v1051 = vpack.c.bf16 %v987, %v987
        %v1052 = vpack.c.bf16 %v988, %v988
        %v1053 = vpack.c.bf16 %v989, %v989
        %v1054 = vpack.c.bf16 %v990, %v990
        %vm1055 = vcmask 257024
        %1056 = vst.msk [vmem:[%s248] sm:$0xf] %vm1055, %v991
        %1057 = vst.msk [vmem:[%s248 + $0x4] sm:$0xf] %vm1055, %v992
        %1058 = vst.msk [vmem:[%s248 + $0x8] sm:$0xf] %vm1055, %v993
        %1059 = vst.msk [vmem:[%s248 + $0xc] sm:$0xf] %vm1055, %v994
        %1060 = vst.msk [vmem:[%s248 + $0x10] sm:$0xf] %vm1055, %v995
        %1061 = vst.msk [vmem:[%s248 + $0x14] sm:$0xf] %vm1055, %v996
        %1062 = vst.msk [vmem:[%s248 + $0x18] sm:$0xf] %vm1055, %v997
        %1063 = vst.msk [vmem:[%s248 + $0x1c] sm:$0xf] %vm1055, %v998
        %1064 = vst.msk [vmem:[%s248 + $0x20] sm:$0xf] %vm1055, %v999
        %1065 = vst.msk [vmem:[%s248 + $0x24] sm:$0xf] %vm1055, %v1000
        %1066 = vst.msk [vmem:[%s248 + $0x28] sm:$0xf] %vm1055, %v1001
        %1067 = vst.msk [vmem:[%s248 + $0x2c] sm:$0xf] %vm1055, %v1002
        %1068 = vst.msk [vmem:[%s248 + $0x30] sm:$0xf] %vm1055, %v1003
        %1069 = vst.msk [vmem:[%s248 + $0x34] sm:$0xf] %vm1055, %v1004
        %1070 = vst.msk [vmem:[%s248 + $0x38] sm:$0xf] %vm1055, %v1005
        %1071 = vst.msk [vmem:[%s248 + $0x3c] sm:$0xf] %vm1055, %v1006
        %1072 = vst.msk [vmem:[%s248 + $0x40] sm:$0xf] %vm1055, %v1007
        %1073 = vst.msk [vmem:[%s248 + $0x44] sm:$0xf] %vm1055, %v1008
        %1074 = vst.msk [vmem:[%s248 + $0x48] sm:$0xf] %vm1055, %v1009
        %1075 = vst.msk [vmem:[%s248 + $0x4c] sm:$0xf] %vm1055, %v1010
        %1076 = vst.msk [vmem:[%s248 + $0x50] sm:$0xf] %vm1055, %v1011
        %1077 = vst.msk [vmem:[%s248 + $0x54] sm:$0xf] %vm1055, %v1012
        %1078 = vst.msk [vmem:[%s248 + $0x58] sm:$0xf] %vm1055, %v1013
        %1079 = vst.msk [vmem:[%s248 + $0x5c] sm:$0xf] %vm1055, %v1014
        %1080 = vst.msk [vmem:[%s248 + $0x60] sm:$0xf] %vm1055, %v1015
        %1081 = vst.msk [vmem:[%s248 + $0x64] sm:$0xf] %vm1055, %v1016
        %1082 = vst.msk [vmem:[%s248 + $0x68] sm:$0xf] %vm1055, %v1017
        %1083 = vst.msk [vmem:[%s248 + $0x6c] sm:$0xf] %vm1055, %v1018
        %1084 = vst.msk [vmem:[%s248 + $0x70] sm:$0xf] %vm1055, %v1019
        %1085 = vst.msk [vmem:[%s248 + $0x74] sm:$0xf] %vm1055, %v1020
        %1086 = vst.msk [vmem:[%s248 + $0x78] sm:$0xf] %vm1055, %v1021
        %1087 = vst.msk [vmem:[%s248 + $0x7c] sm:$0xf] %vm1055, %v1022
        %1088 = vst.msk [vmem:[%s248 + $0x80] sm:$0xf] %vm1055, %v1023
        %1089 = vst.msk [vmem:[%s248 + $0x84] sm:$0xf] %vm1055, %v1024
        %1090 = vst.msk [vmem:[%s248 + $0x88] sm:$0xf] %vm1055, %v1025
        %1091 = vst.msk [vmem:[%s248 + $0x8c] sm:$0xf] %vm1055, %v1026
        %1092 = vst.msk [vmem:[%s248 + $0x90] sm:$0xf] %vm1055, %v1027
        %1093 = vst.msk [vmem:[%s248 + $0x94] sm:$0xf] %vm1055, %v1028
        %1094 = vst.msk [vmem:[%s248 + $0x98] sm:$0xf] %vm1055, %v1029
        %1095 = vst.msk [vmem:[%s248 + $0x9c] sm:$0xf] %vm1055, %v1030
        %1096 = vst.msk [vmem:[%s248 + $0xa0] sm:$0xf] %vm1055, %v1031
        %1097 = vst.msk [vmem:[%s248 + $0xa4] sm:$0xf] %vm1055, %v1032
        %1098 = vst.msk [vmem:[%s248 + $0xa8] sm:$0xf] %vm1055, %v1033
        %1099 = vst.msk [vmem:[%s248 + $0xac] sm:$0xf] %vm1055, %v1034
        %1100 = vst.msk [vmem:[%s248 + $0xb0] sm:$0xf] %vm1055, %v1035
        %1101 = vst.msk [vmem:[%s248 + $0xb4] sm:$0xf] %vm1055, %v1036
        %1102 = vst.msk [vmem:[%s248 + $0xb8] sm:$0xf] %vm1055, %v1037
        %1103 = vst.msk [vmem:[%s248 + $0xbc] sm:$0xf] %vm1055, %v1038
        %1104 = vst.msk [vmem:[%s248 + $0xc0] sm:$0xf] %vm1055, %v1039
        %1105 = vst.msk [vmem:[%s248 + $0xc4] sm:$0xf] %vm1055, %v1040
        %1106 = vst.msk [vmem:[%s248 + $0xc8] sm:$0xf] %vm1055, %v1041
        %1107 = vst.msk [vmem:[%s248 + $0xcc] sm:$0xf] %vm1055, %v1042
        %1108 = vst.msk [vmem:[%s248 + $0xd0] sm:$0xf] %vm1055, %v1043
        %1109 = vst.msk [vmem:[%s248 + $0xd4] sm:$0xf] %vm1055, %v1044
        %1110 = vst.msk [vmem:[%s248 + $0xd8] sm:$0xf] %vm1055, %v1045
        %1111 = vst.msk [vmem:[%s248 + $0xdc] sm:$0xf] %vm1055, %v1046
        %1112 = vst.msk [vmem:[%s248 + $0xe0] sm:$0xf] %vm1055, %v1047
        %1113 = vst.msk [vmem:[%s248 + $0xe4] sm:$0xf] %vm1055, %v1048
        %1114 = vst.msk [vmem:[%s248 + $0xe8] sm:$0xf] %vm1055, %v1049
        %1115 = vst.msk [vmem:[%s248 + $0xec] sm:$0xf] %vm1055, %v1050
        %1116 = vst.msk [vmem:[%s248 + $0xf0] sm:$0xf] %vm1055, %v1051
        %1117 = vst.msk [vmem:[%s248 + $0xf4] sm:$0xf] %vm1055, %v1052
        %1118 = vst.msk [vmem:[%s248 + $0xf8] sm:$0xf] %vm1055, %v1053
        %1119 = vst.msk [vmem:[%s248 + $0xfc] sm:$0xf] %vm1055, %v1054
        %s1120 = sand.u32 %s141, 1
        %s1121 = sand.u32 %s141, 1
        %s1122 = smul.addr %s1121, 256
        %s1123 = scalar_lea.vmem [#allocation2], %s1122
        // Predicated region
        $region37: #{tpu_custom_call.1} parent=35 // pred_check
          %p1124 = pneg %p151
        $region38: #{tpu_custom_call.1} parent=35 // pred_check_branch
          %1126 = sbr.rel (%p1124) target = $region40
        $region39: #{tpu_custom_call.1} parent=35 // pred_region
          %s1127 = smul.u32 64, %s19
          %s1128 = ssub.s32 5551, %s1127
          %p1129 = scmp.lt.s32.totalorder %s1128, 64
          %s1130 = scalar_select %p1129, %s1128, 64
          %s1131 = smul.u32 4, %s1130
          %p1132 = scmp.ne.s32.totalorder 0, %s1131
          %s1133 = sadd.s32 %s20, %s1127
          %s1134 = smul.addr %s1133, 4
          %s1135 = scalar_lea.vmem %s4, %s1134
          // Predicated region
          $region41: #{tpu_custom_call.1} parent=39 // pred_check
            %p1136 = pneg %p1132
          $region42: #{tpu_custom_call.1} parent=39 // pred_check_branch
            %1138 = sbr.rel (%p1136) target = $region44
          $region43: #{tpu_custom_call.1} parent=39 // pred_region
            // Predicated region
            $region45: #{tpu_custom_call.1} parent=43 // pred_check
              _
            $region46: #{tpu_custom_call.1} parent=43 // pred_check_branch
              %1140 = sbr.rel target = $region48
            $region47: #{tpu_custom_call.1} parent=43 // pred_region
              // Predicated region
              $region67: #{tpu_custom_call.1} parent=47 // pred_check
                _
              $region68: #{tpu_custom_call.1} parent=47 // pred_check_branch
                %1252 = sbr.rel (0) target = $region70
              $region69: #{tpu_custom_call.1} parent=47 // pred_region
                %s1254 = ssub.s32 16, 1
                %s1255 = sshrl.u32 %s1130, 5
                // While loop
                $region71: #{tpu_custom_call.1} parent=69 // loop_pre_header
                  _
                $region72: #{tpu_custom_call.1} parent=69 // loop_header
                  %s1257 = sphi 0, %s1259
                  %p1258 = scmp.ge.s32.totalorder %s1257, %s1255
                  %s1262 = sphi 0, %s1331
                  %s1263 = sphi %s1123, %s1334
                  %s1264 = sphi %s1135, %s1335
                $region73: #{tpu_custom_call.1} parent=69 // loop_header_branch
                  %1261 = sbr.rel (%p1258) target = $region77
                $region74: #{tpu_custom_call.1} parent=69 // loop_body
                  %v1265 = vld [vmem:[%s1263] sm:%s1254]
                  %1266 = vst [vmem:[%s1264] sm:%s1254] %v1265
                  %v1267 = vld [vmem:[%s1263 + $0x4] sm:%s1254]
                  %1268 = vst [vmem:[%s1264 + $0x4] sm:%s1254] %v1267
                  %v1269 = vld [vmem:[%s1263 + $0x8] sm:%s1254]
                  %1270 = vst [vmem:[%s1264 + $0x8] sm:%s1254] %v1269
                  %v1271 = vld [vmem:[%s1263 + $0xc] sm:%s1254]
                  %1272 = vst [vmem:[%s1264 + $0xc] sm:%s1254] %v1271
                  %v1273 = vld [vmem:[%s1263 + $0x10] sm:%s1254]
                  %1274 = vst [vmem:[%s1264 + $0x10] sm:%s1254] %v1273
                  %v1275 = vld [vmem:[%s1263 + $0x14] sm:%s1254]
                  %1276 = vst [vmem:[%s1264 + $0x14] sm:%s1254] %v1275
                  %v1277 = vld [vmem:[%s1263 + $0x18] sm:%s1254]
                  %1278 = vst [vmem:[%s1264 + $0x18] sm:%s1254] %v1277
                  %v1279 = vld [vmem:[%s1263 + $0x1c] sm:%s1254]
                  %1280 = vst [vmem:[%s1264 + $0x1c] sm:%s1254] %v1279
                  %v1281 = vld [vmem:[%s1263 + $0x20] sm:%s1254]
                  %1282 = vst [vmem:[%s1264 + $0x20] sm:%s1254] %v1281
                  %v1283 = vld [vmem:[%s1263 + $0x24] sm:%s1254]
                  %1284 = vst [vmem:[%s1264 + $0x24] sm:%s1254] %v1283
                  %v1285 = vld [vmem:[%s1263 + $0x28] sm:%s1254]
                  %1286 = vst [vmem:[%s1264 + $0x28] sm:%s1254] %v1285
                  %v1287 = vld [vmem:[%s1263 + $0x2c] sm:%s1254]
                  %1288 = vst [vmem:[%s1264 + $0x2c] sm:%s1254] %v1287
                  %v1289 = vld [vmem:[%s1263 + $0x30] sm:%s1254]
                  %1290 = vst [vmem:[%s1264 + $0x30] sm:%s1254] %v1289
                  %v1291 = vld [vmem:[%s1263 + $0x34] sm:%s1254]
                  %1292 = vst [vmem:[%s1264 + $0x34] sm:%s1254] %v1291
                  %v1293 = vld [vmem:[%s1263 + $0x38] sm:%s1254]
                  %1294 = vst [vmem:[%s1264 + $0x38] sm:%s1254] %v1293
                  %v1295 = vld [vmem:[%s1263 + $0x3c] sm:%s1254]
                  %1296 = vst [vmem:[%s1264 + $0x3c] sm:%s1254] %v1295
                  %v1297 = vld [vmem:[%s1263 + $0x40] sm:%s1254]
                  %1298 = vst [vmem:[%s1264 + $0x40] sm:%s1254] %v1297
                  %v1299 = vld [vmem:[%s1263 + $0x44] sm:%s1254]
                  %1300 = vst [vmem:[%s1264 + $0x44] sm:%s1254] %v1299
                  %v1301 = vld [vmem:[%s1263 + $0x48] sm:%s1254]
                  %1302 = vst [vmem:[%s1264 + $0x48] sm:%s1254] %v1301
                  %v1303 = vld [vmem:[%s1263 + $0x4c] sm:%s1254]
                  %1304 = vst [vmem:[%s1264 + $0x4c] sm:%s1254] %v1303
                  %v1305 = vld [vmem:[%s1263 + $0x50] sm:%s1254]
                  %1306 = vst [vmem:[%s1264 + $0x50] sm:%s1254] %v1305
                  %v1307 = vld [vmem:[%s1263 + $0x54] sm:%s1254]
                  %1308 = vst [vmem:[%s1264 + $0x54] sm:%s1254] %v1307
                  %v1309 = vld [vmem:[%s1263 + $0x58] sm:%s1254]
                  %1310 = vst [vmem:[%s1264 + $0x58] sm:%s1254] %v1309
                  %v1311 = vld [vmem:[%s1263 + $0x5c] sm:%s1254]
                  %1312 = vst [vmem:[%s1264 + $0x5c] sm:%s1254] %v1311
                  %v1313 = vld [vmem:[%s1263 + $0x60] sm:%s1254]
                  %1314 = vst [vmem:[%s1264 + $0x60] sm:%s1254] %v1313
                  %v1315 = vld [vmem:[%s1263 + $0x64] sm:%s1254]
                  %1316 = vst [vmem:[%s1264 + $0x64] sm:%s1254] %v1315
                  %v1317 = vld [vmem:[%s1263 + $0x68] sm:%s1254]
                  %1318 = vst [vmem:[%s1264 + $0x68] sm:%s1254] %v1317
                  %v1319 = vld [vmem:[%s1263 + $0x6c] sm:%s1254]
                  %1320 = vst [vmem:[%s1264 + $0x6c] sm:%s1254] %v1319
                  %v1321 = vld [vmem:[%s1263 + $0x70] sm:%s1254]
                  %1322 = vst [vmem:[%s1264 + $0x70] sm:%s1254] %v1321
                  %v1323 = vld [vmem:[%s1263 + $0x74] sm:%s1254]
                  %1324 = vst [vmem:[%s1264 + $0x74] sm:%s1254] %v1323
                  %v1325 = vld [vmem:[%s1263 + $0x78] sm:%s1254]
                  %1326 = vst [vmem:[%s1264 + $0x78] sm:%s1254] %v1325
                  %v1327 = vld [vmem:[%s1263 + $0x7c] sm:%s1254]
                  %1328 = vst [vmem:[%s1264 + $0x7c] sm:%s1254] %v1327
                  %s1329 = sadd.s32 1, %s1262
                  %p1330 = scmp.ge.s32.totalorder %s1329, %s1255
                  %s1331 = scalar_select %p1330, 0, %s1329
                  %s1332 = smul.u32 %s1331, 128
                  %s1333 = smul.u32 %s1331, 128
                  %s1334 = scalar_lea.vmem %s1123, %s1332 [#allocation2]
                  %s1335 = scalar_lea.vmem %s1135, %s1333
                $region75: #{tpu_custom_call.1} parent=69 // loop_footer
                  %s1259 = sadd.s32 %s1257, 1
                $region76: #{tpu_custom_call.1} parent=69 // loop_footer_branch
                  %1256 = sbr.rel target = $region72
                $region77: #{tpu_custom_call.1} parent=69 // loop_exit
                  _
                %s1336 = sshrl.u32 %s1130, 5
                %s1337 = sand.u32 %s1130, 31
                %s1338 = smul.u32 %s1336, 32
                %s1339 = smul.u32 4, %s1338
                %s1340 = scalar_lea.vmem %s1123, %s1339 [#allocation2]
                %s1341 = smul.u32 4, %s1338
                %s1342 = scalar_lea.vmem %s1135, %s1341
                // While loop
                $region78: #{tpu_custom_call.1} parent=69 // loop_pre_header
                  _
                $region79: #{tpu_custom_call.1} parent=69 // loop_header
                  %s1344 = sphi 0, %s1346
                  %p1345 = scmp.ge.s32.totalorder %s1344, %s1337
                  %s1349 = sphi 0, %s1356
                  %s1350 = sphi %s1340, %s1359
                  %s1351 = sphi %s1342, %s1360
                $region80: #{tpu_custom_call.1} parent=69 // loop_header_branch
                  %1348 = sbr.rel (%p1345) target = $region84
                $region81: #{tpu_custom_call.1} parent=69 // loop_body
                  %v1352 = vld [vmem:[%s1350] sm:%s1254]
                  %1353 = vst [vmem:[%s1351] sm:%s1254] %v1352
                  %s1354 = sadd.s32 1, %s1349
                  %p1355 = scmp.ge.s32.totalorder %s1354, %s1337
                  %s1356 = scalar_select %p1355, 0, %s1354
                  %s1357 = smul.u32 %s1356, 4
                  %s1358 = smul.u32 %s1356, 4
                  %s1359 = scalar_lea.vmem %s1340, %s1357 [#allocation2]
                  %s1360 = scalar_lea.vmem %s1342, %s1358
                $region82: #{tpu_custom_call.1} parent=69 // loop_footer
                  %s1346 = sadd.s32 %s1344, 1
                $region83: #{tpu_custom_call.1} parent=69 // loop_footer_branch
                  %1343 = sbr.rel target = $region79
                $region84: #{tpu_custom_call.1} parent=69 // loop_exit
                  _
              $region70: #{tpu_custom_call.1} parent=47 // pred_fallthru
                _
            $region48: #{tpu_custom_call.1} parent=43 // pred_fallthru
              _
            // Predicated region
            $region49: #{tpu_custom_call.1} parent=43 // pred_check
              _
            $region50: #{tpu_custom_call.1} parent=43 // pred_check_branch
              %1142 = sbr.rel (0) target = $region52
            $region51: #{tpu_custom_call.1} parent=43 // pred_region
              %s1144 = ssub.s32 16, 1
              %s1145 = sshrl.u32 %s1130, 5
              // While loop
              $region53: #{tpu_custom_call.1} parent=51 // loop_pre_header
                _
              $region54: #{tpu_custom_call.1} parent=51 // loop_header
                %s1147 = sphi 0, %s1149
                %p1148 = scmp.ge.s32.totalorder %s1147, %s1145
                %s1152 = sphi 0, %s1221
                %s1153 = sphi %s1123, %s1224
                %s1154 = sphi %s1135, %s1225
              $region55: #{tpu_custom_call.1} parent=51 // loop_header_branch
                %1151 = sbr.rel (%p1148) target = $region59
              $region56: #{tpu_custom_call.1} parent=51 // loop_body
                %v1155 = vld [vmem:[%s1153] sm:%s1144]
                %1156 = vst [vmem:[%s1154] sm:%s1144] %v1155
                %v1157 = vld [vmem:[%s1153 + $0x4] sm:%s1144]
                %1158 = vst [vmem:[%s1154 + $0x4] sm:%s1144] %v1157
                %v1159 = vld [vmem:[%s1153 + $0x8] sm:%s1144]
                %1160 = vst [vmem:[%s1154 + $0x8] sm:%s1144] %v1159
                %v1161 = vld [vmem:[%s1153 + $0xc] sm:%s1144]
                %1162 = vst [vmem:[%s1154 + $0xc] sm:%s1144] %v1161
                %v1163 = vld [vmem:[%s1153 + $0x10] sm:%s1144]
                %1164 = vst [vmem:[%s1154 + $0x10] sm:%s1144] %v1163
                %v1165 = vld [vmem:[%s1153 + $0x14] sm:%s1144]
                %1166 = vst [vmem:[%s1154 + $0x14] sm:%s1144] %v1165
                %v1167 = vld [vmem:[%s1153 + $0x18] sm:%s1144]
                %1168 = vst [vmem:[%s1154 + $0x18] sm:%s1144] %v1167
                %v1169 = vld [vmem:[%s1153 + $0x1c] sm:%s1144]
                %1170 = vst [vmem:[%s1154 + $0x1c] sm:%s1144] %v1169
                %v1171 = vld [vmem:[%s1153 + $0x20] sm:%s1144]
                %1172 = vst [vmem:[%s1154 + $0x20] sm:%s1144] %v1171
                %v1173 = vld [vmem:[%s1153 + $0x24] sm:%s1144]
                %1174 = vst [vmem:[%s1154 + $0x24] sm:%s1144] %v1173
                %v1175 = vld [vmem:[%s1153 + $0x28] sm:%s1144]
                %1176 = vst [vmem:[%s1154 + $0x28] sm:%s1144] %v1175
                %v1177 = vld [vmem:[%s1153 + $0x2c] sm:%s1144]
                %1178 = vst [vmem:[%s1154 + $0x2c] sm:%s1144] %v1177
                %v1179 = vld [vmem:[%s1153 + $0x30] sm:%s1144]
                %1180 = vst [vmem:[%s1154 + $0x30] sm:%s1144] %v1179
                %v1181 = vld [vmem:[%s1153 + $0x34] sm:%s1144]
                %1182 = vst [vmem:[%s1154 + $0x34] sm:%s1144] %v1181
                %v1183 = vld [vmem:[%s1153 + $0x38] sm:%s1144]
                %1184 = vst [vmem:[%s1154 + $0x38] sm:%s1144] %v1183
                %v1185 = vld [vmem:[%s1153 + $0x3c] sm:%s1144]
                %1186 = vst [vmem:[%s1154 + $0x3c] sm:%s1144] %v1185
                %v1187 = vld [vmem:[%s1153 + $0x40] sm:%s1144]
                %1188 = vst [vmem:[%s1154 + $0x40] sm:%s1144] %v1187
                %v1189 = vld [vmem:[%s1153 + $0x44] sm:%s1144]
                %1190 = vst [vmem:[%s1154 + $0x44] sm:%s1144] %v1189
                %v1191 = vld [vmem:[%s1153 + $0x48] sm:%s1144]
                %1192 = vst [vmem:[%s1154 + $0x48] sm:%s1144] %v1191
                %v1193 = vld [vmem:[%s1153 + $0x4c] sm:%s1144]
                %1194 = vst [vmem:[%s1154 + $0x4c] sm:%s1144] %v1193
                %v1195 = vld [vmem:[%s1153 + $0x50] sm:%s1144]
                %1196 = vst [vmem:[%s1154 + $0x50] sm:%s1144] %v1195
                %v1197 = vld [vmem:[%s1153 + $0x54] sm:%s1144]
                %1198 = vst [vmem:[%s1154 + $0x54] sm:%s1144] %v1197
                %v1199 = vld [vmem:[%s1153 + $0x58] sm:%s1144]
                %1200 = vst [vmem:[%s1154 + $0x58] sm:%s1144] %v1199
                %v1201 = vld [vmem:[%s1153 + $0x5c] sm:%s1144]
                %1202 = vst [vmem:[%s1154 + $0x5c] sm:%s1144] %v1201
                %v1203 = vld [vmem:[%s1153 + $0x60] sm:%s1144]
                %1204 = vst [vmem:[%s1154 + $0x60] sm:%s1144] %v1203
                %v1205 = vld [vmem:[%s1153 + $0x64] sm:%s1144]
                %1206 = vst [vmem:[%s1154 + $0x64] sm:%s1144] %v1205
                %v1207 = vld [vmem:[%s1153 + $0x68] sm:%s1144]
                %1208 = vst [vmem:[%s1154 + $0x68] sm:%s1144] %v1207
                %v1209 = vld [vmem:[%s1153 + $0x6c] sm:%s1144]
                %1210 = vst [vmem:[%s1154 + $0x6c] sm:%s1144] %v1209
                %v1211 = vld [vmem:[%s1153 + $0x70] sm:%s1144]
                %1212 = vst [vmem:[%s1154 + $0x70] sm:%s1144] %v1211
                %v1213 = vld [vmem:[%s1153 + $0x74] sm:%s1144]
                %1214 = vst [vmem:[%s1154 + $0x74] sm:%s1144] %v1213
                %v1215 = vld [vmem:[%s1153 + $0x78] sm:%s1144]
                %1216 = vst [vmem:[%s1154 + $0x78] sm:%s1144] %v1215
                %v1217 = vld [vmem:[%s1153 + $0x7c] sm:%s1144]
                %1218 = vst [vmem:[%s1154 + $0x7c] sm:%s1144] %v1217
                %s1219 = sadd.s32 1, %s1152
                %p1220 = scmp.ge.s32.totalorder %s1219, %s1145
                %s1221 = scalar_select %p1220, 0, %s1219
                %s1222 = smul.u32 %s1221, 128
                %s1223 = smul.u32 %s1221, 128
                %s1224 = scalar_lea.vmem %s1123, %s1222 [#allocation2]
                %s1225 = scalar_lea.vmem %s1135, %s1223
              $region57: #{tpu_custom_call.1} parent=51 // loop_footer
                %s1149 = sadd.s32 %s1147, 1
              $region58: #{tpu_custom_call.1} parent=51 // loop_footer_branch
                %1146 = sbr.rel target = $region54
              $region59: #{tpu_custom_call.1} parent=51 // loop_exit
                _
              %s1226 = sshrl.u32 %s1130, 5
              %s1227 = sand.u32 %s1130, 31
              %s1228 = smul.u32 %s1226, 32
              %s1229 = smul.u32 4, %s1228
              %s1230 = scalar_lea.vmem %s1123, %s1229 [#allocation2]
              %s1231 = smul.u32 4, %s1228
              %s1232 = scalar_lea.vmem %s1135, %s1231
              // While loop
              $region60: #{tpu_custom_call.1} parent=51 // loop_pre_header
                _
              $region61: #{tpu_custom_call.1} parent=51 // loop_header
                %s1234 = sphi 0, %s1236
                %p1235 = scmp.ge.s32.totalorder %s1234, %s1227
                %s1239 = sphi 0, %s1246
                %s1240 = sphi %s1230, %s1249
                %s1241 = sphi %s1232, %s1250
              $region62: #{tpu_custom_call.1} parent=51 // loop_header_branch
                %1238 = sbr.rel (%p1235) target = $region66
              $region63: #{tpu_custom_call.1} parent=51 // loop_body
                %v1242 = vld [vmem:[%s1240] sm:%s1144]
                %1243 = vst [vmem:[%s1241] sm:%s1144] %v1242
                %s1244 = sadd.s32 1, %s1239
                %p1245 = scmp.ge.s32.totalorder %s1244, %s1227
                %s1246 = scalar_select %p1245, 0, %s1244
                %s1247 = smul.u32 %s1246, 4
                %s1248 = smul.u32 %s1246, 4
                %s1249 = scalar_lea.vmem %s1230, %s1247 [#allocation2]
                %s1250 = scalar_lea.vmem %s1232, %s1248
              $region64: #{tpu_custom_call.1} parent=51 // loop_footer
                %s1236 = sadd.s32 %s1234, 1
              $region65: #{tpu_custom_call.1} parent=51 // loop_footer_branch
                %1233 = sbr.rel target = $region61
              $region66: #{tpu_custom_call.1} parent=51 // loop_exit
                _
            $region52: #{tpu_custom_call.1} parent=43 // pred_fallthru
              _
          $region44: #{tpu_custom_call.1} parent=39 // pred_fallthru
            _
          %1361 = vnop
        $region40: #{tpu_custom_call.1} parent=35 // pred_fallthru
          _
      $region36: #{tpu_custom_call.1} parent=5 // pred_fallthru
        _
      %p1362 = scmp.le.s32.totalorder 2, %s10
      // Predicated region
      $region85: #{tpu_custom_call.1} parent=5 // pred_check
        %p1363 = pneg %p1362
      $region86: #{tpu_custom_call.1} parent=5 // pred_check_branch
        %1365 = sbr.rel (%p1363) target = $region88
      $region87: #{tpu_custom_call.1} parent=5 // pred_region
        %s1366 = ssub.s32 %s10, 2
        // Predicated region
        $region89: #{tpu_custom_call.1} parent=87 // pred_check
          %p1367 = pneg %p157
        $region90: #{tpu_custom_call.1} parent=87 // pred_check_branch
          %1369 = sbr.rel (%p1367) target = $region92
        $region91: #{tpu_custom_call.1} parent=87 // pred_region
          %s1370 = sand.u32 %s142, 1
          %s1371 = sand.u32 %s142, 1
          %s1372 = smul.addr %s1371, 256
          %s1373 = scalar_lea.vmem [#allocation2], %s1372
        $region92: #{tpu_custom_call.1} parent=87 // pred_fallthru
          _
      $region88: #{tpu_custom_call.1} parent=5 // pred_fallthru
        _
    $region6: #{tpu_custom_call.1} parent=1 // loop_footer
      %s14 = sadd.s32 1, %s10
    $region7: #{tpu_custom_call.1} parent=1 // loop_footer_branch
      %9 = sbr.rel target = $region3
    $region8: #{tpu_custom_call.1} parent=1 // loop_exit
      _

</llo_original>
